<compile_context>
chip_gen: v7x
topology: tpu7x:2x2x1
jax: 0.10.0
libtpu: 0.0.40
codegen_flags: <defaults>
</compile_context>

<pallas_src>
import functools

import jax
import jax.numpy as jnp
from jax import lax
from jax.experimental import pallas as pl
from jax.experimental.pallas import tpu as pltpu

_LANES = 128


def _cd_loss_kernel(p_ref, g_ref, row_min_ref, d1_ref, p_sq_ref, p_neg2_ref,
                    *, m_valid, tiles_per_split, needs_mask):
    s = pl.program_id(0)              # parallel split of the M-tile range
    j = pl.program_id(1)              # tile index within the split ("arbitrary")
    tile_m = g_ref.shape[0]

    # Prologue (once per split): cache ||p||^2 and -2*P; init lane accumulators.
    @pl.when(j == 0)
    def _():
        p32 = p_ref[...].astype(jnp.float32)
        p_sq_ref[...] = jnp.sum(p32 * p32, axis=1, keepdims=True)       # (N, 1)
        p_neg2_ref[...] = p_ref[...] * (-2.0)                           # (N, D)
        row_min_ref[...] = jnp.full(row_min_ref.shape, jnp.inf,
                                    row_min_ref.dtype)
        d1_ref[...] = jnp.zeros(d1_ref.shape, d1_ref.dtype)

    g = g_ref[...]                                                      # (TM, D)
    g32 = g.astype(jnp.float32)
    g_sq_t = jnp.sum(g32 * g32, axis=1, keepdims=True).T                # (1, TM)

    if needs_mask:
        tile_base = (s * tiles_per_split + j) * tile_m
        col_ids = lax.broadcasted_iota(jnp.int32, (1, tile_m), 1) + tile_base
        valid = col_ids < m_valid                                       # (1, TM)
        # Padded G rows -> +inf squared norm: their d2 columns become +inf
        # without a full (N, TM) select.
        g_sq_t = jnp.where(valid, g_sq_t, jnp.inf)
    else:
        valid = None

    # MXU: (-2*P) @ G^T with the transpose absorbed into the contraction.
    cross = lax.dot_general(
        p_neg2_ref[...], g,
        dimension_numbers=(((1,), (1,)), ((), ())),
        preferred_element_type=jnp.float32)                             # (N, TM)

    # Squared distances; clamp deferred off the full tile.
    d2 = p_sq_ref[...] + g_sq_t + cross                                 # (N, TM)

    # dist1: column mins are complete for this tile (all of P is resident).
    col_min = jnp.min(d2, axis=0, keepdims=True)                        # (1, TM)
    col_dist = jnp.sqrt(jnp.maximum(col_min, 0.0))
    if needs_mask:
        col_dist = jnp.where(valid, col_dist, 0.0)

    # Fold into lane-shaped accumulators: pure VALU mins/adds over lane-aligned
    # 128-wide static slices; cross-lane reductions are deferred to the wrapper.
    rm = row_min_ref[...]                                               # (N, 128)
    d1 = d1_ref[...]                                                    # (1, 128)
    for k in range(tile_m // _LANES):
        sl = slice(k * _LANES, (k + 1) * _LANES)
        rm = jnp.minimum(rm, d2[:, sl])
        d1 = d1 + col_dist[:, sl]
    row_min_ref[...] = rm
    d1_ref[...] = d1


def cd_loss(prediction, ground_truth, *, tile_m=512, num_splits=2):
    """Chamfer distance between two point sets.

    prediction:   (N, D) float
    ground_truth: (M, D) float
    returns: scalar float32
    """
    n, d = prediction.shape
    m, d_g = ground_truth.shape
    assert d == d_g, "feature dims must match"

    # tile_m: multiple of 128, no larger than needed to cover M, shrunk until
    # the (N, tile_m) f32 temporaries fit a conservative cross-generation
    # VMEM budget (v7x has half the VMEM of v5e/v6e).
    tile_m = max(_LANES, (tile_m // _LANES) * _LANES)
    tile_m = min(tile_m, pl.cdiv(m, _LANES) * _LANES)
    vmem_budget = 40 * 1024 * 1024

    def _step_bytes(t):
        # ~3 live (N, t) f32 temporaries + resident P (+ -2P) + double-buffered
        # G tiles + lane-shaped accumulators + ||p||^2.
        return (3 * n * t + 2 * n * d + 4 * t * d + 2 * n * _LANES + n) * 4

    while tile_m > _LANES and _step_bytes(tile_m) > vmem_budget:
        tile_m = max(_LANES, ((tile_m // 2) // _LANES) * _LANES)

    num_tiles = pl.cdiv(m, tile_m)
    num_splits = max(1, min(num_splits, num_tiles))
    tiles_per_split = pl.cdiv(num_tiles, num_splits)
    m_pad = num_splits * tiles_per_split * tile_m
    needs_mask = (m_pad != m)

    g_in = ground_truth.astype(prediction.dtype)
    if m_pad != m:
        g_in = jnp.pad(g_in, ((0, m_pad - m), (0, 0)))

    kernel = functools.partial(
        _cd_loss_kernel,
        m_valid=m, tiles_per_split=tiles_per_split, needs_mask=needs_mask)

    row_min_sq, d1_partial = pl.pallas_call(
        kernel,
        out_shape=(
            jax.ShapeDtypeStruct((n, num_splits * _LANES), jnp.float32),
            jax.ShapeDtypeStruct((1, num_splits * _LANES), jnp.float32),
        ),
        grid_spec=pltpu.PrefetchScalarGridSpec(
            num_scalar_prefetch=0,
            grid=(num_splits, tiles_per_split),
            in_specs=[
                pl.BlockSpec((n, d), lambda s, j: (0, 0)),          # P: resident
                pl.BlockSpec((tile_m, d),
                             lambda s, j: (s * tiles_per_split + j, 0)),
            ],
            out_specs=[
                pl.BlockSpec((n, _LANES), lambda s, j: (0, s)),     # row-min (sq)
                pl.BlockSpec((1, _LANES), lambda s, j: (0, s)),     # dist1 partials
            ],
            scratch_shapes=[
                pltpu.VMEM((n, 1), jnp.float32),                    # ||p||^2
                pltpu.VMEM((n, d), prediction.dtype),               # -2 * P
            ],
        ),
        compiler_params=pltpu.CompilerParams(
            dimension_semantics=("parallel", "arbitrary"),
            vmem_limit_bytes=48 * 1024 * 1024,
        ),
    )(prediction, g_in)

    # Tiny epilogue: cross-lane / cross-split reductions, deferred clamp + sqrt.
    dist2 = jnp.mean(jnp.sqrt(jnp.maximum(jnp.min(row_min_sq, axis=1), 0.0)))
    dist1 = jnp.sum(d1_partial) / m
    return dist1 + dist2


def cd_loss_ref(prediction, ground_truth):
    diff = prediction[:, None, :] - ground_truth[None, :, :]
    dist = jnp.sqrt(jnp.sum(diff * diff, axis=-1))
    dist1 = dist.min(axis=0).mean()
    dist2 = dist.min(axis=1).mean()
    return dist1 + dist2


if __name__ == "__main__":
    key = jax.random.PRNGKey(0)
    k1, k2, k3, k4 = jax.random.split(key, 4)

    # Test 1: tile-aligned shapes (single tile, single split).
    prediction = jax.random.normal(k1, (256, 32), dtype=jnp.float32)
    ground_truth = jax.random.normal(k2, (512, 32), dtype=jnp.float32)
    result = jax.block_until_ready(cd_loss(prediction, ground_truth))
    expected = jax.block_until_ready(cd_loss_ref(prediction, ground_truth))
    assert jnp.allclose(result, expected, rtol=1e-4, atol=1e-4), (result, expected)

    # Test 2: ragged N/M (padding + g_sq-inf mask path, one tile).
    prediction2 = jax.random.normal(k3, (200, 32), dtype=jnp.float32)
    ground_truth2 = jax.random.normal(k4, (500, 32), dtype=jnp.float32)
    result2 = jax.block_until_ready(cd_loss(prediction2, ground_truth2))
    expected2 = jax.block_until_ready(cd_loss_ref(prediction2, ground_truth2))
    assert jnp.allclose(result2, expected2, rtol=1e-4, atol=1e-4), (result2, expected2)

    # Test 3: multi-tile + 2-way parallel split + mask (exercises the v7x path).
    result3 = jax.block_until_ready(
        cd_loss(prediction2, ground_truth2, tile_m=128, num_splits=2))
    assert jnp.allclose(result3, expected2, rtol=1e-4, atol=1e-4), (result3, expected2)

    print("KERNEL_OK")
</pallas_src>

<mosaic_0001>
module attributes {stable_mosaic.version = 11 : i64} {
  func.func @_cd_loss_kernel(%arg0: i32, %arg1: i32, %arg2: memref<256x32xf32, #tpu.memory_space<vmem>>, %arg3: memref<512x32xf32, #tpu.memory_space<vmem>>, %arg4: memref<256x128xf32, #tpu.memory_space<vmem>>, %arg5: memref<1x128xf32, #tpu.memory_space<vmem>>, %arg6: memref<256x1xf32, #tpu.memory_space<vmem>>, %arg7: memref<256x32xf32, #tpu.memory_space<vmem>>) attributes {dimension_semantics = [#tpu.dimension_semantics<parallel>, #tpu.dimension_semantics<arbitrary>], iteration_bounds = array<i64: 1, 1>, scalar_prefetch = 0 : i64, scratch_operands = 2 : i64, tpu.core_type = #tpu.core_type<tc>, window_params = [{pipeline_mode = #tpu.pipeline_mode<synchronous>, transform_indices = @transform_0, window_bounds = array<i64: 256, 32>}, {transform_indices = @transform_1, window_bounds = array<i64: 512, 32>}, {transform_indices = @transform_2, window_bounds = array<i64: 256, 128>}, {transform_indices = @transform_3, window_bounds = array<i64: 1, 128>}]} {
    %c0_i32 = arith.constant 0 : i32
    %0 = arith.cmpi eq, %arg1, %c0_i32 : i32
    %1 = arith.extui %0 : i1 to i32
    %c0_i32_0 = arith.constant 0 : i32
    %2 = arith.cmpi ne, %1, %c0_i32_0 : i32
    scf.if %2 {
      %c0_17 = arith.constant 0 : index
      %c0_18 = arith.constant 0 : index
      %40 = vector.load %arg2[%c0_17, %c0_18] : memref<256x32xf32, #tpu.memory_space<vmem>>, vector<256x32xf32>
      %41 = arith.mulf %40, %40 : vector<256x32xf32>
      %cst_19 = arith.constant dense<0.000000e+00> : vector<256xf32>
      %42 = vector.multi_reduction <add>, %41, %cst_19 [1] : vector<256x32xf32> to vector<256xf32>
      %43 = vector.shape_cast %42 : vector<256xf32> to vector<256x1xf32>
      %c0_20 = arith.constant 0 : index
      %c0_21 = arith.constant 0 : index
      %44 = vector.load %arg6[%c0_20, %c0_21] : memref<256x1xf32, #tpu.memory_space<vmem>>, vector<256x1xf32>
      tpu.vector_store %arg6[%c0_20, %c0_21], %43 {strides = array<i32>} : memref<256x1xf32, #tpu.memory_space<vmem>>, vector<256x1xf32>,
      %c0_22 = arith.constant 0 : index
      %c0_23 = arith.constant 0 : index
      %45 = vector.load %arg2[%c0_22, %c0_23] : memref<256x32xf32, #tpu.memory_space<vmem>>, vector<256x32xf32>
      %cst_24 = arith.constant -2.000000e+00 : f32
      %46 = vector.broadcast %cst_24 : f32 to vector<256x32xf32>
      %47 = arith.mulf %45, %46 : vector<256x32xf32>
      %c0_25 = arith.constant 0 : index
      %c0_26 = arith.constant 0 : index
      %48 = vector.load %arg7[%c0_25, %c0_26] : memref<256x32xf32, #tpu.memory_space<vmem>>, vector<256x32xf32>
      tpu.vector_store %arg7[%c0_25, %c0_26], %47 {strides = array<i32>} : memref<256x32xf32, #tpu.memory_space<vmem>>, vector<256x32xf32>,
      %cst_27 = arith.constant 0x7F800000 : f32
      %49 = vector.broadcast %cst_27 : f32 to vector<256x128xf32>
      %c0_28 = arith.constant 0 : index
      %c0_29 = arith.constant 0 : index
      %50 = vector.load %arg4[%c0_28, %c0_29] : memref<256x128xf32, #tpu.memory_space<vmem>>, vector<256x128xf32>
      tpu.vector_store %arg4[%c0_28, %c0_29], %49 {strides = array<i32>} : memref<256x128xf32, #tpu.memory_space<vmem>>, vector<256x128xf32>,
      %cst_30 = arith.constant 0.000000e+00 : f32
      %51 = vector.broadcast %cst_30 : f32 to vector<1x128xf32>
      %c0_31 = arith.constant 0 : index
      %c0_32 = arith.constant 0 : index
      %52 = vector.load %arg5[%c0_31, %c0_32] : memref<1x128xf32, #tpu.memory_space<vmem>>, vector<1x128xf32>
      tpu.vector_store %arg5[%c0_31, %c0_32], %51 {strides = array<i32>} : memref<1x128xf32, #tpu.memory_space<vmem>>, vector<1x128xf32>,
    } else {
    }
    %c0 = arith.constant 0 : index
    %c0_1 = arith.constant 0 : index
    %3 = vector.load %arg3[%c0, %c0_1] : memref<512x32xf32, #tpu.memory_space<vmem>>, vector<512x32xf32>
    %4 = arith.mulf %3, %3 : vector<512x32xf32>
    %cst = arith.constant dense<0.000000e+00> : vector<512xf32>
    %5 = vector.multi_reduction <add>, %4, %cst [1] : vector<512x32xf32> to vector<512xf32>
    %6 = vector.shape_cast %5 : vector<512xf32> to vector<512x1xf32>
    %7 = tpu.transpose %6, [1, 0] : vector<512x1xf32> -> vector<1x512xf32>
    %c0_2 = arith.constant 0 : index
    %c0_3 = arith.constant 0 : index
    %8 = vector.load %arg7[%c0_2, %c0_3] : memref<256x32xf32, #tpu.memory_space<vmem>>, vector<256x32xf32>
    %cst_4 = arith.constant dense<0.000000e+00> : vector<256x512xf32>
    %9 = tpu.matmul %8, %3, %cst_4 {dimension_numbers = #tpu.dot_dimension_numbers<[1], [1], [0], [0], [0, 0, 1, 0], [], []>} : vector<256x32xf32>, vector<512x32xf32>, vector<256x512xf32> -> vector<256x512xf32>
    %c0_5 = arith.constant 0 : index
    %c0_6 = arith.constant 0 : index
    %10 = vector.load %arg6[%c0_5, %c0_6] : memref<256x1xf32, #tpu.memory_space<vmem>>, vector<256x1xf32>
    %11 = vector.broadcast %10 : vector<256x1xf32> to vector<256x512xf32>
    %12 = vector.broadcast %7 : vector<1x512xf32> to vector<256x512xf32>
    %13 = arith.addf %11, %12 : vector<256x512xf32>
    %14 = arith.addf %13, %9 : vector<256x512xf32>
    %cst_7 = arith.constant dense<0x7F800000> : vector<512xf32>
    %15 = vector.multi_reduction <minimumf>, %14, %cst_7 [0] : vector<256x512xf32> to vector<512xf32>
    %16 = vector.shape_cast %15 : vector<512xf32> to vector<1x512xf32>
    %cst_8 = arith.constant 0.000000e+00 : f32
    %17 = vector.broadcast %cst_8 : f32 to vector<1x512xf32>
    %18 = arith.maximumf %16, %17 : vector<1x512xf32>
    %19 = math.sqrt %18 : vector<1x512xf32>
    %c0_9 = arith.constant 0 : index
    %c0_10 = arith.constant 0 : index
    %20 = vector.load %arg4[%c0_9, %c0_10] : memref<256x128xf32, #tpu.memory_space<vmem>>, vector<256x128xf32>
    %c0_11 = arith.constant 0 : index
    %c0_12 = arith.constant 0 : index
    %21 = vector.load %arg5[%c0_11, %c0_12] : memref<1x128xf32, #tpu.memory_space<vmem>>, vector<1x128xf32>
    %22 = vector.extract_strided_slice %14 {offsets = [0, 0], sizes = [256, 128], strides = [1, 1]} : vector<256x512xf32> to vector<256x128xf32>
    %23 = arith.minimumf %20, %22 : vector<256x128xf32>
    %24 = vector.extract_strided_slice %19 {offsets = [0, 0], sizes = [1, 128], strides = [1, 1]} : vector<1x512xf32> to vector<1x128xf32>
    %25 = arith.addf %21, %24 : vector<1x128xf32>
    %26 = vector.extract_strided_slice %14 {offsets = [0, 128], sizes = [256, 128], strides = [1, 1]} : vector<256x512xf32> to vector<256x128xf32>
    %27 = arith.minimumf %23, %26 : vector<256x128xf32>
    %28 = vector.extract_strided_slice %19 {offsets = [0, 128], sizes = [1, 128], strides = [1, 1]} : vector<1x512xf32> to vector<1x128xf32>
    %29 = arith.addf %25, %28 : vector<1x128xf32>
    %30 = vector.extract_strided_slice %14 {offsets = [0, 256], sizes = [256, 128], strides = [1, 1]} : vector<256x512xf32> to vector<256x128xf32>
    %31 = arith.minimumf %27, %30 : vector<256x128xf32>
    %32 = vector.extract_strided_slice %19 {offsets = [0, 256], sizes = [1, 128], strides = [1, 1]} : vector<1x512xf32> to vector<1x128xf32>
    %33 = arith.addf %29, %32 : vector<1x128xf32>
    %34 = vector.extract_strided_slice %14 {offsets = [0, 384], sizes = [256, 128], strides = [1, 1]} : vector<256x512xf32> to vector<256x128xf32>
    %35 = arith.minimumf %31, %34 : vector<256x128xf32>
    %36 = vector.extract_strided_slice %19 {offsets = [0, 384], sizes = [1, 128], strides = [1, 1]} : vector<1x512xf32> to vector<1x128xf32>
    %37 = arith.addf %33, %36 : vector<1x128xf32>
    %c0_13 = arith.constant 0 : index
    %c0_14 = arith.constant 0 : index
    %38 = vector.load %arg4[%c0_13, %c0_14] : memref<256x128xf32, #tpu.memory_space<vmem>>, vector<256x128xf32>
    tpu.vector_store %arg4[%c0_13, %c0_14], %35 {strides = array<i32>} : memref<256x128xf32, #tpu.memory_space<vmem>>, vector<256x128xf32>,
    %c0_15 = arith.constant 0 : index
    %c0_16 = arith.constant 0 : index
    %39 = vector.load %arg5[%c0_15, %c0_16] : memref<1x128xf32, #tpu.memory_space<vmem>>, vector<1x128xf32>
    tpu.vector_store %arg5[%c0_15, %c0_16], %37 {strides = array<i32>} : memref<1x128xf32, #tpu.memory_space<vmem>>, vector<1x128xf32>,
    return
  }
  func.func @transform_0(%arg0: i32, %arg1: i32) -> (i32, i32) {
    %c0_i32 = arith.constant 0 : i32
    %c0_i32_0 = arith.constant 0 : i32
    %c0_i32_1 = arith.constant 0 : i32
    return %c0_i32, %c0_i32_0 : i32, i32
  }
  func.func @transform_1(%arg0: i32, %arg1: i32) -> (i32, i32) {
    %c1_i32 = arith.constant 1 : i32
    %0 = arith.muli %arg0, %c1_i32 : i32
    %1 = arith.addi %0, %arg1 : i32
    %c0_i32 = arith.constant 0 : i32
    %c0_i32_0 = arith.constant 0 : i32
    return %1, %c0_i32 : i32, i32
  }
  func.func @transform_2(%arg0: i32, %arg1: i32) -> (i32, i32) {
    %c0_i32 = arith.constant 0 : i32
    %c0_i32_0 = arith.constant 0 : i32
    return %c0_i32, %arg0 : i32, i32
  }
  func.func @transform_3(%arg0: i32, %arg1: i32) -> (i32, i32) {
    %c0_i32 = arith.constant 0 : i32
    %c0_i32_0 = arith.constant 0 : i32
    return %c0_i32, %arg0 : i32, i32
  }
}

</mosaic_0001>

<llo_original>
// kernel: tpu_custom_call.1
$region0: #{tpu_custom_call.1}
  #allocation0 [shape = 'u32[]', space=smem, size = 0x4, offset = 0x4, fixed_abs, tag = 'smem constant byte address 0x4 - core index']
  #allocation1 [shape = 'u32[144,128]{1,0:T(1,128)}', space=vmem, size = 0x12000, scoped, tag = 'internal scratch']
  #allocation2 [shape = 'f32[256,1]{1,0:T(8,128)}', space=vmem, size = 0x20000, scoped, tag = 'scratch operand']
  #allocation3 [shape = 'f32[256,32]{1,0:T(8,128)}', space=vmem, size = 0x20000, scoped, tag = 'scratch operand']
  %s0 = inlined_call_operand.vmem [shape: f32[256,32], index: 0, kind: input, shape index: {}]
  %s1 = inlined_call_operand.vmem [shape: f32[512,32], index: 1, kind: input, shape index: {}]
  %s2 = inlined_call_operand.hbm [shape: f32[256,128], index: 2, kind: output, shape index: {0}]
  %s3 = inlined_call_operand.hbm [shape: f32[1,128], index: 3, kind: output, shape index: {1}]
  %4 = xla_tuple %s2, %s3
  %s5 = sld [smem:[#allocation0]]
  $region30: #{tpu_custom_call.1} parent=0
    _
  %s7 = ssub.s32 1, %s5
  %s8 = scalar_select 0, %s7, %s5
  $region1: #{tpu_custom_call.1} parent=0
    #allocation4 [shape = 'u8[131072]{0}', space=vmem, size = 0x20000, scoped, tag = 'output window, operand 0, single buffered']
    #allocation5 [shape = 's32[1]{0}', space=sflag, size = 0x4, scoped, tag = 'scoped memory for tpu_custom_call.1']
    #allocation6 [shape = 'u8[512]{0}', space=vmem, size = 0x400, scoped, tag = 'output window, operand 1, single buffered']
    #allocation7 [shape = 's32[1]{0}', space=sflag, size = 0x4, scoped, tag = 'scoped memory for tpu_custom_call.1']
    %9 = vsyncpa [#allocation5], 0
    %10 = vsyncpa [#allocation7], 0
    // Predicated region
    $region2: #{tpu_custom_call.1} parent=1 // pred_check
      _
    $region3: #{tpu_custom_call.1} parent=1 // pred_check_branch
      %12 = sbr.rel (0) target = $region5
    $region4: #{tpu_custom_call.1} parent=1 // pred_region
      _
    $region5: #{tpu_custom_call.1} parent=1 // pred_fallthru
      _
    // Predicated region
    $region6: #{tpu_custom_call.1} parent=1 // pred_check
      _
    $region7: #{tpu_custom_call.1} parent=1 // pred_check_branch
      %14 = sbr.rel (0) target = $region9
    $region8: #{tpu_custom_call.1} parent=1 // pred_region
      %s15 = sadd.s32 0, 0
      %s16 = smul.u32 64, %s15
      %p17 = scmp.lt.s32.totalorder %s16, 63
      %s18 = scalar_select %p17, %s16, 63
      %s19 = smul.addr %s18, 8
      %s20 = scalar_lea.vmem %s1, %s19
      %s21 = sadd.s32 0, 0
      %s22 = smul.u32 64, %s21
    $region9: #{tpu_custom_call.1} parent=1 // pred_fallthru
      _
    %s23 = sadd.s32 0, 0
    %s24 = smul.u32 64, %s23
    %p25 = scmp.lt.s32.totalorder %s24, 63
    %s26 = scalar_select %p25, %s24, 63
    %s27 = smul.addr %s26, 8
    %s28 = scalar_lea.vmem %s1, %s27
    %s29 = sadd.s32 0, 0
    %s30 = smul.u32 64, %s29
    %p31 = scmp.lt.s32.totalorder %s30, 63
    %s32 = scalar_select %p31, %s30, 63
    %s33 = smul.addr %s32, 8
    %s34 = scalar_lea.vmem %s1, %s33
    %s35 = sadd.s32 0, 0
    %s36 = smul.u32 64, %s35
    %p37 = scmp.eq.s32.totalorder 0, 0
    // Predicated region
    $region10: #{tpu_custom_call.1} parent=1 // pred_check
      %p38 = pneg %p37
    $region11: #{tpu_custom_call.1} parent=1 // pred_check_branch
      %40 = sbr.rel (%p38) target = $region13
    $region12: #{tpu_custom_call.1} parent=1 // pred_region
      %v41 = vld [vmem:[%s0] sm:$0xff]
      %v42 = vld [vmem:[%s0 + $0x8] sm:$0xff]
      %v43 = vld [vmem:[%s0 + $0x10] sm:$0xff]
      %v44 = vld [vmem:[%s0 + $0x18] sm:$0xff]
      %v45 = vld [vmem:[%s0 + $0x20] sm:$0xff]
      %v46 = vld [vmem:[%s0 + $0x28] sm:$0xff]
      %v47 = vld [vmem:[%s0 + $0x30] sm:$0xff]
      %v48 = vld [vmem:[%s0 + $0x38] sm:$0xff]
      %v49 = vld [vmem:[%s0 + $0x40] sm:$0xff]
      %v50 = vld [vmem:[%s0 + $0x48] sm:$0xff]
      %v51 = vld [vmem:[%s0 + $0x50] sm:$0xff]
      %v52 = vld [vmem:[%s0 + $0x58] sm:$0xff]
      %v53 = vld [vmem:[%s0 + $0x60] sm:$0xff]
      %v54 = vld [vmem:[%s0 + $0x68] sm:$0xff]
      %v55 = vld [vmem:[%s0 + $0x70] sm:$0xff]
      %v56 = vld [vmem:[%s0 + $0x78] sm:$0xff]
      %v57 = vld [vmem:[%s0 + $0x80] sm:$0xff]
      %v58 = vld [vmem:[%s0 + $0x88] sm:$0xff]
      %v59 = vld [vmem:[%s0 + $0x90] sm:$0xff]
      %v60 = vld [vmem:[%s0 + $0x98] sm:$0xff]
      %v61 = vld [vmem:[%s0 + $0xa0] sm:$0xff]
      %v62 = vld [vmem:[%s0 + $0xa8] sm:$0xff]
      %v63 = vld [vmem:[%s0 + $0xb0] sm:$0xff]
      %v64 = vld [vmem:[%s0 + $0xb8] sm:$0xff]
      %v65 = vld [vmem:[%s0 + $0xc0] sm:$0xff]
      %v66 = vld [vmem:[%s0 + $0xc8] sm:$0xff]
      %v67 = vld [vmem:[%s0 + $0xd0] sm:$0xff]
      %v68 = vld [vmem:[%s0 + $0xd8] sm:$0xff]
      %v69 = vld [vmem:[%s0 + $0xe0] sm:$0xff]
      %v70 = vld [vmem:[%s0 + $0xe8] sm:$0xff]
      %v71 = vld [vmem:[%s0 + $0xf0] sm:$0xff]
      %v72 = vld [vmem:[%s0 + $0xf8] sm:$0xff]
      %v73 = vmul.f32 %v41, %v41
      %v74 = vmul.f32 %v42, %v42
      %v75 = vmul.f32 %v43, %v43
      %v76 = vmul.f32 %v44, %v44
      %v77 = vmul.f32 %v45, %v45
      %v78 = vmul.f32 %v46, %v46
      %v79 = vmul.f32 %v47, %v47
      %v80 = vmul.f32 %v48, %v48
      %v81 = vmul.f32 %v49, %v49
      %v82 = vmul.f32 %v50, %v50
      %v83 = vmul.f32 %v51, %v51
      %v84 = vmul.f32 %v52, %v52
      %v85 = vmul.f32 %v53, %v53
      %v86 = vmul.f32 %v54, %v54
      %v87 = vmul.f32 %v55, %v55
      %v88 = vmul.f32 %v56, %v56
      %v89 = vmul.f32 %v57, %v57
      %v90 = vmul.f32 %v58, %v58
      %v91 = vmul.f32 %v59, %v59
      %v92 = vmul.f32 %v60, %v60
      %v93 = vmul.f32 %v61, %v61
      %v94 = vmul.f32 %v62, %v62
      %v95 = vmul.f32 %v63, %v63
      %v96 = vmul.f32 %v64, %v64
      %v97 = vmul.f32 %v65, %v65
      %v98 = vmul.f32 %v66, %v66
      %v99 = vmul.f32 %v67, %v67
      %v100 = vmul.f32 %v68, %v68
      %v101 = vmul.f32 %v69, %v69
      %v102 = vmul.f32 %v70, %v70
      %v103 = vmul.f32 %v71, %v71
      %v104 = vmul.f32 %v72, %v72
      %vm105 = vcmask 261120
      %v106 = vsel %vm105, %v73, 0.0
      %107 = vadd.xlane.f32.xlu0 %v106
      %v108 = vpop.xlane.xlu0 %107
      %v109 = vsel %vm105, %v74, 0.0
      %110 = vadd.xlane.f32.xlu0 %v109
      %v111 = vpop.xlane.xlu0 %110
      %v112 = vsel %vm105, %v75, 0.0
      %113 = vadd.xlane.f32.xlu0 %v112
      %v114 = vpop.xlane.xlu0 %113
      %v115 = vsel %vm105, %v76, 0.0
      %116 = vadd.xlane.f32.xlu0 %v115
      %v117 = vpop.xlane.xlu0 %116
      %v118 = vsel %vm105, %v77, 0.0
      %119 = vadd.xlane.f32.xlu0 %v118
      %v120 = vpop.xlane.xlu0 %119
      %v121 = vsel %vm105, %v78, 0.0
      %122 = vadd.xlane.f32.xlu0 %v121
      %v123 = vpop.xlane.xlu0 %122
      %v124 = vsel %vm105, %v79, 0.0
      %125 = vadd.xlane.f32.xlu0 %v124
      %v126 = vpop.xlane.xlu0 %125
      %v127 = vsel %vm105, %v80, 0.0
      %128 = vadd.xlane.f32.xlu0 %v127
      %v129 = vpop.xlane.xlu0 %128
      %v130 = vsel %vm105, %v81, 0.0
      %131 = vadd.xlane.f32.xlu0 %v130
      %v132 = vpop.xlane.xlu0 %131
      %v133 = vsel %vm105, %v82, 0.0
      %134 = vadd.xlane.f32.xlu0 %v133
      %v135 = vpop.xlane.xlu0 %134
      %v136 = vsel %vm105, %v83, 0.0
      %137 = vadd.xlane.f32.xlu0 %v136
      %v138 = vpop.xlane.xlu0 %137
      %v139 = vsel %vm105, %v84, 0.0
      %140 = vadd.xlane.f32.xlu0 %v139
      %v141 = vpop.xlane.xlu0 %140
      %v142 = vsel %vm105, %v85, 0.0
      %143 = vadd.xlane.f32.xlu0 %v142
      %v144 = vpop.xlane.xlu0 %143
      %v145 = vsel %vm105, %v86, 0.0
      %146 = vadd.xlane.f32.xlu0 %v145
      %v147 = vpop.xlane.xlu0 %146
      %v148 = vsel %vm105, %v87, 0.0
      %149 = vadd.xlane.f32.xlu0 %v148
      %v150 = vpop.xlane.xlu0 %149
      %v151 = vsel %vm105, %v88, 0.0
      %152 = vadd.xlane.f32.xlu0 %v151
      %v153 = vpop.xlane.xlu0 %152
      %v154 = vsel %vm105, %v89, 0.0
      %155 = vadd.xlane.f32.xlu0 %v154
      %v156 = vpop.xlane.xlu0 %155
      %v157 = vsel %vm105, %v90, 0.0
      %158 = vadd.xlane.f32.xlu0 %v157
      %v159 = vpop.xlane.xlu0 %158
      %v160 = vsel %vm105, %v91, 0.0
      %161 = vadd.xlane.f32.xlu0 %v160
      %v162 = vpop.xlane.xlu0 %161
      %v163 = vsel %vm105, %v92, 0.0
      %164 = vadd.xlane.f32.xlu0 %v163
      %v165 = vpop.xlane.xlu0 %164
      %v166 = vsel %vm105, %v93, 0.0
      %167 = vadd.xlane.f32.xlu0 %v166
      %v168 = vpop.xlane.xlu0 %167
      %v169 = vsel %vm105, %v94, 0.0
      %170 = vadd.xlane.f32.xlu0 %v169
      %v171 = vpop.xlane.xlu0 %170
      %v172 = vsel %vm105, %v95, 0.0
      %173 = vadd.xlane.f32.xlu0 %v172
      %v174 = vpop.xlane.xlu0 %173
      %v175 = vsel %vm105, %v96, 0.0
      %176 = vadd.xlane.f32.xlu0 %v175
      %v177 = vpop.xlane.xlu0 %176
      %v178 = vsel %vm105, %v97, 0.0
      %179 = vadd.xlane.f32.xlu0 %v178
      %v180 = vpop.xlane.xlu0 %179
      %v181 = vsel %vm105, %v98, 0.0
      %182 = vadd.xlane.f32.xlu0 %v181
      %v183 = vpop.xlane.xlu0 %182
      %v184 = vsel %vm105, %v99, 0.0
      %185 = vadd.xlane.f32.xlu0 %v184
      %v186 = vpop.xlane.xlu0 %185
      %v187 = vsel %vm105, %v100, 0.0
      %188 = vadd.xlane.f32.xlu0 %v187
      %v189 = vpop.xlane.xlu0 %188
      %v190 = vsel %vm105, %v101, 0.0
      %191 = vadd.xlane.f32.xlu0 %v190
      %v192 = vpop.xlane.xlu0 %191
      %v193 = vsel %vm105, %v102, 0.0
      %194 = vadd.xlane.f32.xlu0 %v193
      %v195 = vpop.xlane.xlu0 %194
      %v196 = vsel %vm105, %v103, 0.0
      %197 = vadd.xlane.f32.xlu0 %v196
      %v198 = vpop.xlane.xlu0 %197
      %v199 = vsel %vm105, %v104, 0.0
      %200 = vadd.xlane.f32.xlu0 %v199
      %v201 = vpop.xlane.xlu0 %200
      %vm202 = vcmask 7168
      %203 = vst.msk [vmem:[#allocation2] sm:$0xff] %vm202, %v108
      %204 = vst.msk [vmem:[#allocation2 + $0x8] sm:$0xff] %vm202, %v111
      %205 = vst.msk [vmem:[#allocation2 + $0x10] sm:$0xff] %vm202, %v114
      %206 = vst.msk [vmem:[#allocation2 + $0x18] sm:$0xff] %vm202, %v117
      %207 = vst.msk [vmem:[#allocation2 + $0x20] sm:$0xff] %vm202, %v120
      %208 = vst.msk [vmem:[#allocation2 + $0x28] sm:$0xff] %vm202, %v123
      %209 = vst.msk [vmem:[#allocation2 + $0x30] sm:$0xff] %vm202, %v126
      %210 = vst.msk [vmem:[#allocation2 + $0x38] sm:$0xff] %vm202, %v129
      %211 = vst.msk [vmem:[#allocation2 + $0x40] sm:$0xff] %vm202, %v132
      %212 = vst.msk [vmem:[#allocation2 + $0x48] sm:$0xff] %vm202, %v135
      %213 = vst.msk [vmem:[#allocation2 + $0x50] sm:$0xff] %vm202, %v138
      %214 = vst.msk [vmem:[#allocation2 + $0x58] sm:$0xff] %vm202, %v141
      %215 = vst.msk [vmem:[#allocation2 + $0x60] sm:$0xff] %vm202, %v144
      %216 = vst.msk [vmem:[#allocation2 + $0x68] sm:$0xff] %vm202, %v147
      %217 = vst.msk [vmem:[#allocation2 + $0x70] sm:$0xff] %vm202, %v150
      %218 = vst.msk [vmem:[#allocation2 + $0x78] sm:$0xff] %vm202, %v153
      %219 = vst.msk [vmem:[#allocation2 + $0x80] sm:$0xff] %vm202, %v156
      %220 = vst.msk [vmem:[#allocation2 + $0x88] sm:$0xff] %vm202, %v159
      %221 = vst.msk [vmem:[#allocation2 + $0x90] sm:$0xff] %vm202, %v162
      %222 = vst.msk [vmem:[#allocation2 + $0x98] sm:$0xff] %vm202, %v165
      %223 = vst.msk [vmem:[#allocation2 + $0xa0] sm:$0xff] %vm202, %v168
      %224 = vst.msk [vmem:[#allocation2 + $0xa8] sm:$0xff] %vm202, %v171
      %225 = vst.msk [vmem:[#allocation2 + $0xb0] sm:$0xff] %vm202, %v174
      %226 = vst.msk [vmem:[#allocation2 + $0xb8] sm:$0xff] %vm202, %v177
      %227 = vst.msk [vmem:[#allocation2 + $0xc0] sm:$0xff] %vm202, %v180
      %228 = vst.msk [vmem:[#allocation2 + $0xc8] sm:$0xff] %vm202, %v183
      %229 = vst.msk [vmem:[#allocation2 + $0xd0] sm:$0xff] %vm202, %v186
      %230 = vst.msk [vmem:[#allocation2 + $0xd8] sm:$0xff] %vm202, %v189
      %231 = vst.msk [vmem:[#allocation2 + $0xe0] sm:$0xff] %vm202, %v192
      %232 = vst.msk [vmem:[#allocation2 + $0xe8] sm:$0xff] %vm202, %v195
      %233 = vst.msk [vmem:[#allocation2 + $0xf0] sm:$0xff] %vm202, %v198
      %234 = vst.msk [vmem:[#allocation2 + $0xf8] sm:$0xff] %vm202, %v201
      %v235 = vld [vmem:[%s0] sm:$0xff]
      %v236 = vld [vmem:[%s0 + $0x8] sm:$0xff]
      %v237 = vld [vmem:[%s0 + $0x10] sm:$0xff]
      %v238 = vld [vmem:[%s0 + $0x18] sm:$0xff]
      %v239 = vld [vmem:[%s0 + $0x20] sm:$0xff]
      %v240 = vld [vmem:[%s0 + $0x28] sm:$0xff]
      %v241 = vld [vmem:[%s0 + $0x30] sm:$0xff]
      %v242 = vld [vmem:[%s0 + $0x38] sm:$0xff]
      %v243 = vld [vmem:[%s0 + $0x40] sm:$0xff]
      %v244 = vld [vmem:[%s0 + $0x48] sm:$0xff]
      %v245 = vld [vmem:[%s0 + $0x50] sm:$0xff]
      %v246 = vld [vmem:[%s0 + $0x58] sm:$0xff]
      %v247 = vld [vmem:[%s0 + $0x60] sm:$0xff]
      %v248 = vld [vmem:[%s0 + $0x68] sm:$0xff]
      %v249 = vld [vmem:[%s0 + $0x70] sm:$0xff]
      %v250 = vld [vmem:[%s0 + $0x78] sm:$0xff]
      %v251 = vld [vmem:[%s0 + $0x80] sm:$0xff]
      %v252 = vld [vmem:[%s0 + $0x88] sm:$0xff]
      %v253 = vld [vmem:[%s0 + $0x90] sm:$0xff]
      %v254 = vld [vmem:[%s0 + $0x98] sm:$0xff]
      %v255 = vld [vmem:[%s0 + $0xa0] sm:$0xff]
      %v256 = vld [vmem:[%s0 + $0xa8] sm:$0xff]
      %v257 = vld [vmem:[%s0 + $0xb0] sm:$0xff]
      %v258 = vld [vmem:[%s0 + $0xb8] sm:$0xff]
      %v259 = vld [vmem:[%s0 + $0xc0] sm:$0xff]
      %v260 = vld [vmem:[%s0 + $0xc8] sm:$0xff]
      %v261 = vld [vmem:[%s0 + $0xd0] sm:$0xff]
      %v262 = vld [vmem:[%s0 + $0xd8] sm:$0xff]
      %v263 = vld [vmem:[%s0 + $0xe0] sm:$0xff]
      %v264 = vld [vmem:[%s0 + $0xe8] sm:$0xff]
      %v265 = vld [vmem:[%s0 + $0xf0] sm:$0xff]
      %v266 = vld [vmem:[%s0 + $0xf8] sm:$0xff]
      %v267 = vmul.f32 %v235, -2.0
      %v268 = vmul.f32 %v236, -2.0
      %v269 = vmul.f32 %v237, -2.0
      %v270 = vmul.f32 %v238, -2.0
      %v271 = vmul.f32 %v239, -2.0
      %v272 = vmul.f32 %v240, -2.0
      %v273 = vmul.f32 %v241, -2.0
      %v274 = vmul.f32 %v242, -2.0
      %v275 = vmul.f32 %v243, -2.0
      %v276 = vmul.f32 %v244, -2.0
      %v277 = vmul.f32 %v245, -2.0
      %v278 = vmul.f32 %v246, -2.0
      %v279 = vmul.f32 %v247, -2.0
      %v280 = vmul.f32 %v248, -2.0
      %v281 = vmul.f32 %v249, -2.0
      %v282 = vmul.f32 %v250, -2.0
      %v283 = vmul.f32 %v251, -2.0
      %v284 = vmul.f32 %v252, -2.0
      %v285 = vmul.f32 %v253, -2.0
      %v286 = vmul.f32 %v254, -2.0
      %v287 = vmul.f32 %v255, -2.0
      %v288 = vmul.f32 %v256, -2.0
      %v289 = vmul.f32 %v257, -2.0
      %v290 = vmul.f32 %v258, -2.0
      %v291 = vmul.f32 %v259, -2.0
      %v292 = vmul.f32 %v260, -2.0
      %v293 = vmul.f32 %v261, -2.0
      %v294 = vmul.f32 %v262, -2.0
      %v295 = vmul.f32 %v263, -2.0
      %v296 = vmul.f32 %v264, -2.0
      %v297 = vmul.f32 %v265, -2.0
      %v298 = vmul.f32 %v266, -2.0
      %299 = vst.msk [vmem:[#allocation3] sm:$0xff] %vm105, %v267
      %300 = vst.msk [vmem:[#allocation3 + $0x8] sm:$0xff] %vm105, %v268
      %301 = vst.msk [vmem:[#allocation3 + $0x10] sm:$0xff] %vm105, %v269
      %302 = vst.msk [vmem:[#allocation3 + $0x18] sm:$0xff] %vm105, %v270
      %303 = vst.msk [vmem:[#allocation3 + $0x20] sm:$0xff] %vm105, %v271
      %304 = vst.msk [vmem:[#allocation3 + $0x28] sm:$0xff] %vm105, %v272
      %305 = vst.msk [vmem:[#allocation3 + $0x30] sm:$0xff] %vm105, %v273
      %306 = vst.msk [vmem:[#allocation3 + $0x38] sm:$0xff] %vm105, %v274
      %307 = vst.msk [vmem:[#allocation3 + $0x40] sm:$0xff] %vm105, %v275
      %308 = vst.msk [vmem:[#allocation3 + $0x48] sm:$0xff] %vm105, %v276
      %309 = vst.msk [vmem:[#allocation3 + $0x50] sm:$0xff] %vm105, %v277
      %310 = vst.msk [vmem:[#allocation3 + $0x58] sm:$0xff] %vm105, %v278
      %311 = vst.msk [vmem:[#allocation3 + $0x60] sm:$0xff] %vm105, %v279
      %312 = vst.msk [vmem:[#allocation3 + $0x68] sm:$0xff] %vm105, %v280
      %313 = vst.msk [vmem:[#allocation3 + $0x70] sm:$0xff] %vm105, %v281
      %314 = vst.msk [vmem:[#allocation3 + $0x78] sm:$0xff] %vm105, %v282
      %315 = vst.msk [vmem:[#allocation3 + $0x80] sm:$0xff] %vm105, %v283
      %316 = vst.msk [vmem:[#allocation3 + $0x88] sm:$0xff] %vm105, %v284
      %317 = vst.msk [vmem:[#allocation3 + $0x90] sm:$0xff] %vm105, %v285
      %318 = vst.msk [vmem:[#allocation3 + $0x98] sm:$0xff] %vm105, %v286
      %319 = vst.msk [vmem:[#allocation3 + $0xa0] sm:$0xff] %vm105, %v287
      %320 = vst.msk [vmem:[#allocation3 + $0xa8] sm:$0xff] %vm105, %v288
      %321 = vst.msk [vmem:[#allocation3 + $0xb0] sm:$0xff] %vm105, %v289
      %322 = vst.msk [vmem:[#allocation3 + $0xb8] sm:$0xff] %vm105, %v290
      %323 = vst.msk [vmem:[#allocation3 + $0xc0] sm:$0xff] %vm105, %v291
      %324 = vst.msk [vmem:[#allocation3 + $0xc8] sm:$0xff] %vm105, %v292
      %325 = vst.msk [vmem:[#allocation3 + $0xd0] sm:$0xff] %vm105, %v293
      %326 = vst.msk [vmem:[#allocation3 + $0xd8] sm:$0xff] %vm105, %v294
      %327 = vst.msk [vmem:[#allocation3 + $0xe0] sm:$0xff] %vm105, %v295
      %328 = vst.msk [vmem:[#allocation3 + $0xe8] sm:$0xff] %vm105, %v296
      %329 = vst.msk [vmem:[#allocation3 + $0xf0] sm:$0xff] %vm105, %v297
      %330 = vst.msk [vmem:[#allocation3 + $0xf8] sm:$0xff] %vm105, %v298
      %331 = vst [vmem:[#allocation4] sm:$0xff] inf
      %332 = vst [vmem:[#allocation4 + $0x8] sm:$0xff] inf
      %333 = vst [vmem:[#allocation4 + $0x10] sm:$0xff] inf
      %334 = vst [vmem:[#allocation4 + $0x18] sm:$0xff] inf
      %335 = vst [vmem:[#allocation4 + $0x20] sm:$0xff] inf
      %336 = vst [vmem:[#allocation4 + $0x28] sm:$0xff] inf
      %337 = vst [vmem:[#allocation4 + $0x30] sm:$0xff] inf
      %338 = vst [vmem:[#allocation4 + $0x38] sm:$0xff] inf
      %339 = vst [vmem:[#allocation4 + $0x40] sm:$0xff] inf
      %340 = vst [vmem:[#allocation4 + $0x48] sm:$0xff] inf
      %341 = vst [vmem:[#allocation4 + $0x50] sm:$0xff] inf
      %342 = vst [vmem:[#allocation4 + $0x58] sm:$0xff] inf
      %343 = vst [vmem:[#allocation4 + $0x60] sm:$0xff] inf
      %344 = vst [vmem:[#allocation4 + $0x68] sm:$0xff] inf
      %345 = vst [vmem:[#allocation4 + $0x70] sm:$0xff] inf
      %346 = vst [vmem:[#allocation4 + $0x78] sm:$0xff] inf
      %347 = vst [vmem:[#allocation4 + $0x80] sm:$0xff] inf
      %348 = vst [vmem:[#allocation4 + $0x88] sm:$0xff] inf
      %349 = vst [vmem:[#allocation4 + $0x90] sm:$0xff] inf
      %350 = vst [vmem:[#allocation4 + $0x98] sm:$0xff] inf
      %351 = vst [vmem:[#allocation4 + $0xa0] sm:$0xff] inf
      %352 = vst [vmem:[#allocation4 + $0xa8] sm:$0xff] inf
      %353 = vst [vmem:[#allocation4 + $0xb0] sm:$0xff] inf
      %354 = vst [vmem:[#allocation4 + $0xb8] sm:$0xff] inf
      %355 = vst [vmem:[#allocation4 + $0xc0] sm:$0xff] inf
      %356 = vst [vmem:[#allocation4 + $0xc8] sm:$0xff] inf
      %357 = vst [vmem:[#allocation4 + $0xd0] sm:$0xff] inf
      %358 = vst [vmem:[#allocation4 + $0xd8] sm:$0xff] inf
      %359 = vst [vmem:[#allocation4 + $0xe0] sm:$0xff] inf
      %360 = vst [vmem:[#allocation4 + $0xe8] sm:$0xff] inf
      %361 = vst [vmem:[#allocation4 + $0xf0] sm:$0xff] inf
      %362 = vst [vmem:[#allocation4 + $0xf8] sm:$0xff] inf
      %363 = vst [vmem:[#allocation6] sm:$0x1] 0.0
    $region13: #{tpu_custom_call.1} parent=1 // pred_fallthru
      _
    %v364 = vld [vmem:[%s34] sm:$0xff]
    %v365 = vld [vmem:[%s34 + $0x8] sm:$0xff]
    %v366 = vld [vmem:[%s34 + $0x10] sm:$0xff]
    %v367 = vld [vmem:[%s34 + $0x18] sm:$0xff]
    %v368 = vld [vmem:[%s34 + $0x20] sm:$0xff]
    %v369 = vld [vmem:[%s34 + $0x28] sm:$0xff]
    %v370 = vld [vmem:[%s34 + $0x30] sm:$0xff]
    %v371 = vld [vmem:[%s34 + $0x38] sm:$0xff]
    %v372 = vld [vmem:[%s34 + $0x40] sm:$0xff]
    %v373 = vld [vmem:[%s34 + $0x48] sm:$0xff]
    %v374 = vld [vmem:[%s34 + $0x50] sm:$0xff]
    %v375 = vld [vmem:[%s34 + $0x58] sm:$0xff]
    %v376 = vld [vmem:[%s34 + $0x60] sm:$0xff]
    %v377 = vld [vmem:[%s34 + $0x68] sm:$0xff]
    %v378 = vld [vmem:[%s34 + $0x70] sm:$0xff]
    %v379 = vld [vmem:[%s34 + $0x78] sm:$0xff]
    %v380 = vld [vmem:[%s34 + $0x80] sm:$0xff]
    %v381 = vld [vmem:[%s34 + $0x88] sm:$0xff]
    %v382 = vld [vmem:[%s34 + $0x90] sm:$0xff]
    %v383 = vld [vmem:[%s34 + $0x98] sm:$0xff]
    %v384 = vld [vmem:[%s34 + $0xa0] sm:$0xff]
    %v385 = vld [vmem:[%s34 + $0xa8] sm:$0xff]
    %v386 = vld [vmem:[%s34 + $0xb0] sm:$0xff]
    %v387 = vld [vmem:[%s34 + $0xb8] sm:$0xff]
    %v388 = vld [vmem:[%s34 + $0xc0] sm:$0xff]
    %v389 = vld [vmem:[%s34 + $0xc8] sm:$0xff]
    %v390 = vld [vmem:[%s34 + $0xd0] sm:$0xff]
    %v391 = vld [vmem:[%s34 + $0xd8] sm:$0xff]
    %v392 = vld [vmem:[%s34 + $0xe0] sm:$0xff]
    %v393 = vld [vmem:[%s34 + $0xe8] sm:$0xff]
    %v394 = vld [vmem:[%s34 + $0xf0] sm:$0xff]
    %v395 = vld [vmem:[%s34 + $0xf8] sm:$0xff]
    %v396 = vld [vmem:[%s34 + $0x100] sm:$0xff]
    %v397 = vld [vmem:[%s34 + $0x108] sm:$0xff]
    %v398 = vld [vmem:[%s34 + $0x110] sm:$0xff]
    %v399 = vld [vmem:[%s34 + $0x118] sm:$0xff]
    %v400 = vld [vmem:[%s34 + $0x120] sm:$0xff]
    %v401 = vld [vmem:[%s34 + $0x128] sm:$0xff]
    %v402 = vld [vmem:[%s34 + $0x130] sm:$0xff]
    %v403 = vld [vmem:[%s34 + $0x138] sm:$0xff]
    %v404 = vld [vmem:[%s34 + $0x140] sm:$0xff]
    %v405 = vld [vmem:[%s34 + $0x148] sm:$0xff]
    %v406 = vld [vmem:[%s34 + $0x150] sm:$0xff]
    %v407 = vld [vmem:[%s34 + $0x158] sm:$0xff]
    %v408 = vld [vmem:[%s34 + $0x160] sm:$0xff]
    %v409 = vld [vmem:[%s34 + $0x168] sm:$0xff]
    %v410 = vld [vmem:[%s34 + $0x170] sm:$0xff]
    %v411 = vld [vmem:[%s34 + $0x178] sm:$0xff]
    %v412 = vld [vmem:[%s34 + $0x180] sm:$0xff]
    %v413 = vld [vmem:[%s34 + $0x188] sm:$0xff]
    %v414 = vld [vmem:[%s34 + $0x190] sm:$0xff]
    %v415 = vld [vmem:[%s34 + $0x198] sm:$0xff]
    %v416 = vld [vmem:[%s34 + $0x1a0] sm:$0xff]
    %v417 = vld [vmem:[%s34 + $0x1a8] sm:$0xff]
    %v418 = vld [vmem:[%s34 + $0x1b0] sm:$0xff]
    %v419 = vld [vmem:[%s34 + $0x1b8] sm:$0xff]
    %v420 = vld [vmem:[%s34 + $0x1c0] sm:$0xff]
    %v421 = vld [vmem:[%s34 + $0x1c8] sm:$0xff]
    %v422 = vld [vmem:[%s34 + $0x1d0] sm:$0xff]
    %v423 = vld [vmem:[%s34 + $0x1d8] sm:$0xff]
    %v424 = vld [vmem:[%s34 + $0x1e0] sm:$0xff]
    %v425 = vld [vmem:[%s34 + $0x1e8] sm:$0xff]
    %v426 = vld [vmem:[%s34 + $0x1f0] sm:$0xff]
    %v427 = vld [vmem:[%s34 + $0x1f8] sm:$0xff]
    %v428 = vmul.f32 %v364, %v364
    %v429 = vmul.f32 %v365, %v365
    %v430 = vmul.f32 %v366, %v366
    %v431 = vmul.f32 %v367, %v367
    %v432 = vmul.f32 %v368, %v368
    %v433 = vmul.f32 %v369, %v369
    %v434 = vmul.f32 %v370, %v370
    %v435 = vmul.f32 %v371, %v371
    %v436 = vmul.f32 %v372, %v372
    %v437 = vmul.f32 %v373, %v373
    %v438 = vmul.f32 %v374, %v374
    %v439 = vmul.f32 %v375, %v375
    %v440 = vmul.f32 %v376, %v376
    %v441 = vmul.f32 %v377, %v377
    %v442 = vmul.f32 %v378, %v378
    %v443 = vmul.f32 %v379, %v379
    %v444 = vmul.f32 %v380, %v380
    %v445 = vmul.f32 %v381, %v381
    %v446 = vmul.f32 %v382, %v382
    %v447 = vmul.f32 %v383, %v383
    %v448 = vmul.f32 %v384, %v384
    %v449 = vmul.f32 %v385, %v385
    %v450 = vmul.f32 %v386, %v386
    %v451 = vmul.f32 %v387, %v387
    %v452 = vmul.f32 %v388, %v388
    %v453 = vmul.f32 %v389, %v389
    %v454 = vmul.f32 %v390, %v390
    %v455 = vmul.f32 %v391, %v391
    %v456 = vmul.f32 %v392, %v392
    %v457 = vmul.f32 %v393, %v393
    %v458 = vmul.f32 %v394, %v394
    %v459 = vmul.f32 %v395, %v395
    %v460 = vmul.f32 %v396, %v396
    %v461 = vmul.f32 %v397, %v397
    %v462 = vmul.f32 %v398, %v398
    %v463 = vmul.f32 %v399, %v399
    %v464 = vmul.f32 %v400, %v400
    %v465 = vmul.f32 %v401, %v401
    %v466 = vmul.f32 %v402, %v402
    %v467 = vmul.f32 %v403, %v403
    %v468 = vmul.f32 %v404, %v404
    %v469 = vmul.f32 %v405, %v405
    %v470 = vmul.f32 %v406, %v406
    %v471 = vmul.f32 %v407, %v407
    %v472 = vmul.f32 %v408, %v408
    %v473 = vmul.f32 %v409, %v409
    %v474 = vmul.f32 %v410, %v410
    %v475 = vmul.f32 %v411, %v411
    %v476 = vmul.f32 %v412, %v412
    %v477 = vmul.f32 %v413, %v413
    %v478 = vmul.f32 %v414, %v414
    %v479 = vmul.f32 %v415, %v415
    %v480 = vmul.f32 %v416, %v416
    %v481 = vmul.f32 %v417, %v417
    %v482 = vmul.f32 %v418, %v418
    %v483 = vmul.f32 %v419, %v419
    %v484 = vmul.f32 %v420, %v420
    %v485 = vmul.f32 %v421, %v421
    %v486 = vmul.f32 %v422, %v422
    %v487 = vmul.f32 %v423, %v423
    %v488 = vmul.f32 %v424, %v424
    %v489 = vmul.f32 %v425, %v425
    %v490 = vmul.f32 %v426, %v426
    %v491 = vmul.f32 %v427, %v427
    %vm492 = vcmask 261120
    %v493 = vsel %vm492, %v428, 0.0
    %494 = vadd.xlane.f32.xlu0 %v493
    %v495 = vpop.xlane.xlu0 %494
    %v496 = vsel %vm492, %v429, 0.0
    %497 = vadd.xlane.f32.xlu0 %v496
    %v498 = vpop.xlane.xlu0 %497
    %v499 = vsel %vm492, %v430, 0.0
    %500 = vadd.xlane.f32.xlu0 %v499
    %v501 = vpop.xlane.xlu0 %500
    %v502 = vsel %vm492, %v431, 0.0
    %503 = vadd.xlane.f32.xlu0 %v502
    %v504 = vpop.xlane.xlu0 %503
    %v505 = vsel %vm492, %v432, 0.0
    %506 = vadd.xlane.f32.xlu0 %v505
    %v507 = vpop.xlane.xlu0 %506
    %v508 = vsel %vm492, %v433, 0.0
    %509 = vadd.xlane.f32.xlu0 %v508
    %v510 = vpop.xlane.xlu0 %509
    %v511 = vsel %vm492, %v434, 0.0
    %512 = vadd.xlane.f32.xlu0 %v511
    %v513 = vpop.xlane.xlu0 %512
    %v514 = vsel %vm492, %v435, 0.0
    %515 = vadd.xlane.f32.xlu0 %v514
    %v516 = vpop.xlane.xlu0 %515
    %v517 = vsel %vm492, %v436, 0.0
    %518 = vadd.xlane.f32.xlu0 %v517
    %v519 = vpop.xlane.xlu0 %518
    %v520 = vsel %vm492, %v437, 0.0
    %521 = vadd.xlane.f32.xlu0 %v520
    %v522 = vpop.xlane.xlu0 %521
    %v523 = vsel %vm492, %v438, 0.0
    %524 = vadd.xlane.f32.xlu0 %v523
    %v525 = vpop.xlane.xlu0 %524
    %v526 = vsel %vm492, %v439, 0.0
    %527 = vadd.xlane.f32.xlu0 %v526
    %v528 = vpop.xlane.xlu0 %527
    %v529 = vsel %vm492, %v440, 0.0
    %530 = vadd.xlane.f32.xlu0 %v529
    %v531 = vpop.xlane.xlu0 %530
    %v532 = vsel %vm492, %v441, 0.0
    %533 = vadd.xlane.f32.xlu0 %v532
    %v534 = vpop.xlane.xlu0 %533
    %v535 = vsel %vm492, %v442, 0.0
    %536 = vadd.xlane.f32.xlu0 %v535
    %v537 = vpop.xlane.xlu0 %536
    %v538 = vsel %vm492, %v443, 0.0
    %539 = vadd.xlane.f32.xlu0 %v538
    %v540 = vpop.xlane.xlu0 %539
    %v541 = vsel %vm492, %v444, 0.0
    %542 = vadd.xlane.f32.xlu0 %v541
    %v543 = vpop.xlane.xlu0 %542
    %v544 = vsel %vm492, %v445, 0.0
    %545 = vadd.xlane.f32.xlu0 %v544
    %v546 = vpop.xlane.xlu0 %545
    %v547 = vsel %vm492, %v446, 0.0
    %548 = vadd.xlane.f32.xlu0 %v547
    %v549 = vpop.xlane.xlu0 %548
    %v550 = vsel %vm492, %v447, 0.0
    %551 = vadd.xlane.f32.xlu0 %v550
    %v552 = vpop.xlane.xlu0 %551
    %v553 = vsel %vm492, %v448, 0.0
    %554 = vadd.xlane.f32.xlu0 %v553
    %v555 = vpop.xlane.xlu0 %554
    %v556 = vsel %vm492, %v449, 0.0
    %557 = vadd.xlane.f32.xlu0 %v556
    %v558 = vpop.xlane.xlu0 %557
    %v559 = vsel %vm492, %v450, 0.0
    %560 = vadd.xlane.f32.xlu0 %v559
    %v561 = vpop.xlane.xlu0 %560
    %v562 = vsel %vm492, %v451, 0.0
    %563 = vadd.xlane.f32.xlu0 %v562
    %v564 = vpop.xlane.xlu0 %563
    %v565 = vsel %vm492, %v452, 0.0
    %566 = vadd.xlane.f32.xlu0 %v565
    %v567 = vpop.xlane.xlu0 %566
    %v568 = vsel %vm492, %v453, 0.0
    %569 = vadd.xlane.f32.xlu0 %v568
    %v570 = vpop.xlane.xlu0 %569
    %v571 = vsel %vm492, %v454, 0.0
    %572 = vadd.xlane.f32.xlu0 %v571
    %v573 = vpop.xlane.xlu0 %572
    %v574 = vsel %vm492, %v455, 0.0
    %575 = vadd.xlane.f32.xlu0 %v574
    %v576 = vpop.xlane.xlu0 %575
    %v577 = vsel %vm492, %v456, 0.0
    %578 = vadd.xlane.f32.xlu0 %v577
    %v579 = vpop.xlane.xlu0 %578
    %v580 = vsel %vm492, %v457, 0.0
    %581 = vadd.xlane.f32.xlu0 %v580
    %v582 = vpop.xlane.xlu0 %581
    %v583 = vsel %vm492, %v458, 0.0
    %584 = vadd.xlane.f32.xlu0 %v583
    %v585 = vpop.xlane.xlu0 %584
    %v586 = vsel %vm492, %v459, 0.0
    %587 = vadd.xlane.f32.xlu0 %v586
    %v588 = vpop.xlane.xlu0 %587
    %v589 = vsel %vm492, %v460, 0.0
    %590 = vadd.xlane.f32.xlu0 %v589
    %v591 = vpop.xlane.xlu0 %590
    %v592 = vsel %vm492, %v461, 0.0
    %593 = vadd.xlane.f32.xlu0 %v592
    %v594 = vpop.xlane.xlu0 %593
    %v595 = vsel %vm492, %v462, 0.0
    %596 = vadd.xlane.f32.xlu0 %v595
    %v597 = vpop.xlane.xlu0 %596
    %v598 = vsel %vm492, %v463, 0.0
    %599 = vadd.xlane.f32.xlu0 %v598
    %v600 = vpop.xlane.xlu0 %599
    %v601 = vsel %vm492, %v464, 0.0
    %602 = vadd.xlane.f32.xlu0 %v601
    %v603 = vpop.xlane.xlu0 %602
    %v604 = vsel %vm492, %v465, 0.0
    %605 = vadd.xlane.f32.xlu0 %v604
    %v606 = vpop.xlane.xlu0 %605
    %v607 = vsel %vm492, %v466, 0.0
    %608 = vadd.xlane.f32.xlu0 %v607
    %v609 = vpop.xlane.xlu0 %608
    %v610 = vsel %vm492, %v467, 0.0
    %611 = vadd.xlane.f32.xlu0 %v610
    %v612 = vpop.xlane.xlu0 %611
    %v613 = vsel %vm492, %v468, 0.0
    %614 = vadd.xlane.f32.xlu0 %v613
    %v615 = vpop.xlane.xlu0 %614
    %v616 = vsel %vm492, %v469, 0.0
    %617 = vadd.xlane.f32.xlu0 %v616
    %v618 = vpop.xlane.xlu0 %617
    %v619 = vsel %vm492, %v470, 0.0
    %620 = vadd.xlane.f32.xlu0 %v619
    %v621 = vpop.xlane.xlu0 %620
    %v622 = vsel %vm492, %v471, 0.0
    %623 = vadd.xlane.f32.xlu0 %v622
    %v624 = vpop.xlane.xlu0 %623
    %v625 = vsel %vm492, %v472, 0.0
    %626 = vadd.xlane.f32.xlu0 %v625
    %v627 = vpop.xlane.xlu0 %626
    %v628 = vsel %vm492, %v473, 0.0
    %629 = vadd.xlane.f32.xlu0 %v628
    %v630 = vpop.xlane.xlu0 %629
    %v631 = vsel %vm492, %v474, 0.0
    %632 = vadd.xlane.f32.xlu0 %v631
    %v633 = vpop.xlane.xlu0 %632
    %v634 = vsel %vm492, %v475, 0.0
    %635 = vadd.xlane.f32.xlu0 %v634
    %v636 = vpop.xlane.xlu0 %635
    %v637 = vsel %vm492, %v476, 0.0
    %638 = vadd.xlane.f32.xlu0 %v637
    %v639 = vpop.xlane.xlu0 %638
    %v640 = vsel %vm492, %v477, 0.0
    %641 = vadd.xlane.f32.xlu0 %v640
    %v642 = vpop.xlane.xlu0 %641
    %v643 = vsel %vm492, %v478, 0.0
    %644 = vadd.xlane.f32.xlu0 %v643
    %v645 = vpop.xlane.xlu0 %644
    %v646 = vsel %vm492, %v479, 0.0
    %647 = vadd.xlane.f32.xlu0 %v646
    %v648 = vpop.xlane.xlu0 %647
    %v649 = vsel %vm492, %v480, 0.0
    %650 = vadd.xlane.f32.xlu0 %v649
    %v651 = vpop.xlane.xlu0 %650
    %v652 = vsel %vm492, %v481, 0.0
    %653 = vadd.xlane.f32.xlu0 %v652
    %v654 = vpop.xlane.xlu0 %653
    %v655 = vsel %vm492, %v482, 0.0
    %656 = vadd.xlane.f32.xlu0 %v655
    %v657 = vpop.xlane.xlu0 %656
    %v658 = vsel %vm492, %v483, 0.0
    %659 = vadd.xlane.f32.xlu0 %v658
    %v660 = vpop.xlane.xlu0 %659
    %v661 = vsel %vm492, %v484, 0.0
    %662 = vadd.xlane.f32.xlu0 %v661
    %v663 = vpop.xlane.xlu0 %662
    %v664 = vsel %vm492, %v485, 0.0
    %665 = vadd.xlane.f32.xlu0 %v664
    %v666 = vpop.xlane.xlu0 %665
    %v667 = vsel %vm492, %v486, 0.0
    %668 = vadd.xlane.f32.xlu0 %v667
    %v669 = vpop.xlane.xlu0 %668
    %v670 = vsel %vm492, %v487, 0.0
    %671 = vadd.xlane.f32.xlu0 %v670
    %v672 = vpop.xlane.xlu0 %671
    %v673 = vsel %vm492, %v488, 0.0
    %674 = vadd.xlane.f32.xlu0 %v673
    %v675 = vpop.xlane.xlu0 %674
    %v676 = vsel %vm492, %v489, 0.0
    %677 = vadd.xlane.f32.xlu0 %v676
    %v678 = vpop.xlane.xlu0 %677
    %v679 = vsel %vm492, %v490, 0.0
    %680 = vadd.xlane.f32.xlu0 %v679
    %v681 = vpop.xlane.xlu0 %680
    %v682 = vsel %vm492, %v491, 0.0
    %683 = vadd.xlane.f32.xlu0 %v682
    %v684 = vpop.xlane.xlu0 %683
    %685 = vxpose.xlu0.b32.start [1/16] %v495, 128
    %686 = vxpose.xlu0.b32.cont [2/16] %v498, 128
    %687 = vxpose.xlu0.b32.cont [3/16] %v501, 128
    %688 = vxpose.xlu0.b32.cont [4/16] %v504, 128
    %689 = vxpose.xlu0.b32.cont [5/16] %v507, 128
    %690 = vxpose.xlu0.b32.cont [6/16] %v510, 128
    %691 = vxpose.xlu0.b32.cont [7/16] %v513, 128
    %692 = vxpose.xlu0.b32.cont [8/16] %v516, 128
    %693 = vxpose.xlu0.b32.cont [9/16] %v519, 128
    %694 = vxpose.xlu0.b32.cont [10/16] %v522, 128
    %695 = vxpose.xlu0.b32.cont [11/16] %v525, 128
    %696 = vxpose.xlu0.b32.cont [12/16] %v528, 128
    %697 = vxpose.xlu0.b32.cont [13/16] %v531, 128
    %698 = vxpose.xlu0.b32.cont [14/16] %v534, 128
    %699 = vxpose.xlu0.b32.cont [15/16] %v537, 128
    %700 = vxpose.xlu0.b32.end [16/16] %v540, 128
    %v701 = vpop.trf.xlu0
    %v702 = vpop.trf.xlu0
    %v703 = vpop.trf.xlu0
    %v704 = vpop.trf.xlu0
    %v705 = vpop.trf.xlu0
    %v706 = vpop.trf.xlu0
    %v707 = vpop.trf.xlu0
    %v708 = vpop.trf.xlu0
    %v709 = vpop.trf.xlu0
    %v710 = vpop.trf.xlu0
    %v711 = vpop.trf.xlu0
    %v712 = vpop.trf.xlu0
    %v713 = vpop.trf.xlu0
    %v714 = vpop.trf.xlu0
    %v715 = vpop.trf.xlu0
    %v716 = vpop.trf.xlu0
    %717 = vxpose.xlu0.b32.start [1/16] %v543, 128
    %718 = vxpose.xlu0.b32.cont [2/16] %v546, 128
    %719 = vxpose.xlu0.b32.cont [3/16] %v549, 128
    %720 = vxpose.xlu0.b32.cont [4/16] %v552, 128
    %721 = vxpose.xlu0.b32.cont [5/16] %v555, 128
    %722 = vxpose.xlu0.b32.cont [6/16] %v558, 128
    %723 = vxpose.xlu0.b32.cont [7/16] %v561, 128
    %724 = vxpose.xlu0.b32.cont [8/16] %v564, 128
    %725 = vxpose.xlu0.b32.cont [9/16] %v567, 128
    %726 = vxpose.xlu0.b32.cont [10/16] %v570, 128
    %727 = vxpose.xlu0.b32.cont [11/16] %v573, 128
    %728 = vxpose.xlu0.b32.cont [12/16] %v576, 128
    %729 = vxpose.xlu0.b32.cont [13/16] %v579, 128
    %730 = vxpose.xlu0.b32.cont [14/16] %v582, 128
    %731 = vxpose.xlu0.b32.cont [15/16] %v585, 128
    %732 = vxpose.xlu0.b32.end [16/16] %v588, 128
    %v733 = vpop.trf.xlu0
    %v734 = vpop.trf.xlu0
    %v735 = vpop.trf.xlu0
    %v736 = vpop.trf.xlu0
    %v737 = vpop.trf.xlu0
    %v738 = vpop.trf.xlu0
    %v739 = vpop.trf.xlu0
    %v740 = vpop.trf.xlu0
    %v741 = vpop.trf.xlu0
    %v742 = vpop.trf.xlu0
    %v743 = vpop.trf.xlu0
    %v744 = vpop.trf.xlu0
    %v745 = vpop.trf.xlu0
    %v746 = vpop.trf.xlu0
    %v747 = vpop.trf.xlu0
    %v748 = vpop.trf.xlu0
    %749 = vxpose.xlu0.b32.start [1/16] %v591, 128
    %750 = vxpose.xlu0.b32.cont [2/16] %v594, 128
    %751 = vxpose.xlu0.b32.cont [3/16] %v597, 128
    %752 = vxpose.xlu0.b32.cont [4/16] %v600, 128
    %753 = vxpose.xlu0.b32.cont [5/16] %v603, 128
    %754 = vxpose.xlu0.b32.cont [6/16] %v606, 128
    %755 = vxpose.xlu0.b32.cont [7/16] %v609, 128
    %756 = vxpose.xlu0.b32.cont [8/16] %v612, 128
    %757 = vxpose.xlu0.b32.cont [9/16] %v615, 128
    %758 = vxpose.xlu0.b32.cont [10/16] %v618, 128
    %759 = vxpose.xlu0.b32.cont [11/16] %v621, 128
    %760 = vxpose.xlu0.b32.cont [12/16] %v624, 128
    %761 = vxpose.xlu0.b32.cont [13/16] %v627, 128
    %762 = vxpose.xlu0.b32.cont [14/16] %v630, 128
    %763 = vxpose.xlu0.b32.cont [15/16] %v633, 128
    %764 = vxpose.xlu0.b32.end [16/16] %v636, 128
    %v765 = vpop.trf.xlu0
    %v766 = vpop.trf.xlu0
    %v767 = vpop.trf.xlu0
    %v768 = vpop.trf.xlu0
    %v769 = vpop.trf.xlu0
    %v770 = vpop.trf.xlu0
    %v771 = vpop.trf.xlu0
    %v772 = vpop.trf.xlu0
    %v773 = vpop.trf.xlu0
    %v774 = vpop.trf.xlu0
    %v775 = vpop.trf.xlu0
    %v776 = vpop.trf.xlu0
    %v777 = vpop.trf.xlu0
    %v778 = vpop.trf.xlu0
    %v779 = vpop.trf.xlu0
    %v780 = vpop.trf.xlu0
    %781 = vxpose.xlu0.b32.start [1/16] %v639, 128
    %782 = vxpose.xlu0.b32.cont [2/16] %v642, 128
    %783 = vxpose.xlu0.b32.cont [3/16] %v645, 128
    %784 = vxpose.xlu0.b32.cont [4/16] %v648, 128
    %785 = vxpose.xlu0.b32.cont [5/16] %v651, 128
    %786 = vxpose.xlu0.b32.cont [6/16] %v654, 128
    %787 = vxpose.xlu0.b32.cont [7/16] %v657, 128
    %788 = vxpose.xlu0.b32.cont [8/16] %v660, 128
    %789 = vxpose.xlu0.b32.cont [9/16] %v663, 128
    %790 = vxpose.xlu0.b32.cont [10/16] %v666, 128
    %791 = vxpose.xlu0.b32.cont [11/16] %v669, 128
    %792 = vxpose.xlu0.b32.cont [12/16] %v672, 128
    %793 = vxpose.xlu0.b32.cont [13/16] %v675, 128
    %794 = vxpose.xlu0.b32.cont [14/16] %v678, 128
    %795 = vxpose.xlu0.b32.cont [15/16] %v681, 128
    %796 = vxpose.xlu0.b32.end [16/16] %v684, 128
    %v797 = vpop.trf.xlu0
    %v798 = vpop.trf.xlu0
    %v799 = vpop.trf.xlu0
    %v800 = vpop.trf.xlu0
    %v801 = vpop.trf.xlu0
    %v802 = vpop.trf.xlu0
    %v803 = vpop.trf.xlu0
    %v804 = vpop.trf.xlu0
    %v805 = vpop.trf.xlu0
    %v806 = vpop.trf.xlu0
    %v807 = vpop.trf.xlu0
    %v808 = vpop.trf.xlu0
    %v809 = vpop.trf.xlu0
    %v810 = vpop.trf.xlu0
    %v811 = vpop.trf.xlu0
    %v812 = vpop.trf.xlu0
    %v813 = vld [vmem:[#allocation3] sm:$0xff]
    %v814 = vld [vmem:[#allocation3 + $0x8] sm:$0xff]
    %v815 = vld [vmem:[#allocation3 + $0x10] sm:$0xff]
    %v816 = vld [vmem:[#allocation3 + $0x18] sm:$0xff]
    %v817 = vld [vmem:[#allocation3 + $0x20] sm:$0xff]
    %v818 = vld [vmem:[#allocation3 + $0x28] sm:$0xff]
    %v819 = vld [vmem:[#allocation3 + $0x30] sm:$0xff]
    %v820 = vld [vmem:[#allocation3 + $0x38] sm:$0xff]
    %v821 = vld [vmem:[#allocation3 + $0x40] sm:$0xff]
    %v822 = vld [vmem:[#allocation3 + $0x48] sm:$0xff]
    %v823 = vld [vmem:[#allocation3 + $0x50] sm:$0xff]
    %v824 = vld [vmem:[#allocation3 + $0x58] sm:$0xff]
    %v825 = vld [vmem:[#allocation3 + $0x60] sm:$0xff]
    %v826 = vld [vmem:[#allocation3 + $0x68] sm:$0xff]
    %v827 = vld [vmem:[#allocation3 + $0x70] sm:$0xff]
    %v828 = vld [vmem:[#allocation3 + $0x78] sm:$0xff]
    %v829 = vld [vmem:[#allocation3 + $0x80] sm:$0xff]
    %v830 = vld [vmem:[#allocation3 + $0x88] sm:$0xff]
    %v831 = vld [vmem:[#allocation3 + $0x90] sm:$0xff]
    %v832 = vld [vmem:[#allocation3 + $0x98] sm:$0xff]
    %v833 = vld [vmem:[#allocation3 + $0xa0] sm:$0xff]
    %v834 = vld [vmem:[#allocation3 + $0xa8] sm:$0xff]
    %v835 = vld [vmem:[#allocation3 + $0xb0] sm:$0xff]
    %v836 = vld [vmem:[#allocation3 + $0xb8] sm:$0xff]
    %v837 = vld [vmem:[#allocation3 + $0xc0] sm:$0xff]
    %v838 = vld [vmem:[#allocation3 + $0xc8] sm:$0xff]
    %v839 = vld [vmem:[#allocation3 + $0xd0] sm:$0xff]
    %v840 = vld [vmem:[#allocation3 + $0xd8] sm:$0xff]
    %v841 = vld [vmem:[#allocation3 + $0xe0] sm:$0xff]
    %v842 = vld [vmem:[#allocation3 + $0xe8] sm:$0xff]
    %v843 = vld [vmem:[#allocation3 + $0xf0] sm:$0xff]
    %v844 = vld [vmem:[#allocation3 + $0xf8] sm:$0xff]
    %v846 = vsel %vm492, %v813, 0
    %v849 = vsel %vm492, %v814, 0
    %v852 = vsel %vm492, %v815, 0
    %v855 = vsel %vm492, %v816, 0
    %v858 = vsel %vm492, %v817, 0
    %v861 = vsel %vm492, %v818, 0
    %v864 = vsel %vm492, %v819, 0
    %v867 = vsel %vm492, %v820, 0
    %v870 = vsel %vm492, %v821, 0
    %v873 = vsel %vm492, %v822, 0
    %v876 = vsel %vm492, %v823, 0
    %v879 = vsel %vm492, %v824, 0
    %v882 = vsel %vm492, %v825, 0
    %v885 = vsel %vm492, %v826, 0
    %v888 = vsel %vm492, %v827, 0
    %v891 = vsel %vm492, %v828, 0
    %v894 = vsel %vm492, %v829, 0
    %v897 = vsel %vm492, %v830, 0
    %v900 = vsel %vm492, %v831, 0
    %v903 = vsel %vm492, %v832, 0
    %v906 = vsel %vm492, %v833, 0
    %v909 = vsel %vm492, %v834, 0
    %v912 = vsel %vm492, %v835, 0
    %v915 = vsel %vm492, %v836, 0
    %v918 = vsel %vm492, %v837, 0
    %v921 = vsel %vm492, %v838, 0
    %v924 = vsel %vm492, %v839, 0
    %v927 = vsel %vm492, %v840, 0
    %v930 = vsel %vm492, %v841, 0
    %v933 = vsel %vm492, %v842, 0
    %v936 = vsel %vm492, %v843, 0
    %v939 = vsel %vm492, %v844, 0
    %v942 = vsel %vm492, %v364, 0
    %v945 = vsel %vm492, %v365, 0
    %v948 = vsel %vm492, %v366, 0
    %v951 = vsel %vm492, %v367, 0
    %v954 = vsel %vm492, %v368, 0
    %v957 = vsel %vm492, %v369, 0
    %v960 = vsel %vm492, %v370, 0
    %v963 = vsel %vm492, %v371, 0
    %v966 = vsel %vm492, %v372, 0
    %v969 = vsel %vm492, %v373, 0
    %v972 = vsel %vm492, %v374, 0
    %v975 = vsel %vm492, %v375, 0
    %v978 = vsel %vm492, %v376, 0
    %v981 = vsel %vm492, %v377, 0
    %v984 = vsel %vm492, %v378, 0
    %v987 = vsel %vm492, %v379, 0
    %v990 = vsel %vm492, %v380, 0
    %v993 = vsel %vm492, %v381, 0
    %v996 = vsel %vm492, %v382, 0
    %v999 = vsel %vm492, %v383, 0
    %v1002 = vsel %vm492, %v384, 0
    %v1005 = vsel %vm492, %v385, 0
    %v1008 = vsel %vm492, %v386, 0
    %v1011 = vsel %vm492, %v387, 0
    %v1014 = vsel %vm492, %v388, 0
    %v1017 = vsel %vm492, %v389, 0
    %v1020 = vsel %vm492, %v390, 0
    %v1023 = vsel %vm492, %v391, 0
    %v1026 = vsel %vm492, %v392, 0
    %v1029 = vsel %vm492, %v393, 0
    %v1032 = vsel %vm492, %v394, 0
    %v1035 = vsel %vm492, %v395, 0
    %v1038 = vsel %vm492, %v396, 0
    %v1041 = vsel %vm492, %v397, 0
    %v1044 = vsel %vm492, %v398, 0
    %v1047 = vsel %vm492, %v399, 0
    %v1050 = vsel %vm492, %v400, 0
    %v1053 = vsel %vm492, %v401, 0
    %v1056 = vsel %vm492, %v402, 0
    %v1059 = vsel %vm492, %v403, 0
    %v1062 = vsel %vm492, %v404, 0
    %v1065 = vsel %vm492, %v405, 0
    %v1068 = vsel %vm492, %v406, 0
    %v1071 = vsel %vm492, %v407, 0
    %v1074 = vsel %vm492, %v408, 0
    %v1077 = vsel %vm492, %v409, 0
    %v1080 = vsel %vm492, %v410, 0
    %v1083 = vsel %vm492, %v411, 0
    %v1086 = vsel %vm492, %v412, 0
    %v1089 = vsel %vm492, %v413, 0
    %v1092 = vsel %vm492, %v414, 0
    %v1095 = vsel %vm492, %v415, 0
    %v1098 = vsel %vm492, %v416, 0
    %v1101 = vsel %vm492, %v417, 0
    %v1104 = vsel %vm492, %v418, 0
    %v1107 = vsel %vm492, %v419, 0
    %v1110 = vsel %vm492, %v420, 0
    %v1113 = vsel %vm492, %v421, 0
    %v1116 = vsel %vm492, %v422, 0
    %v1119 = vsel %vm492, %v423, 0
    %v1122 = vsel %vm492, %v424, 0
    %v1125 = vsel %vm492, %v425, 0
    %v1128 = vsel %vm492, %v426, 0
    %v1131 = vsel %vm492, %v427, 0
    %1133 = vmatprep.subr.mxu0 0.0
    %1134 = vmatpush1.xpose.msra.mxu0 %v942
    %1135 = vmatprep.subr.mxu0 0.0
    %1136 = vmatpush1.xpose.msra.mxu0 %v945
    %1137 = vmatprep.subr.mxu0 0.0
    %1138 = vmatpush1.xpose.msra.mxu0 %v948
    %1139 = vmatprep.subr.mxu0 0.0
    %1140 = vmatpush1.xpose.msra.mxu0 %v951
    %1141 = vmatprep.subr.mxu0 0.0
    %1142 = vmatpush1.xpose.msra.mxu0 %v954
    %1143 = vmatprep.subr.mxu0 0.0
    %1144 = vmatpush1.xpose.msra.mxu0 %v957
    %1145 = vmatprep.subr.mxu0 0.0
    %1146 = vmatpush1.xpose.msra.mxu0 %v960
    %1147 = vmatprep.subr.mxu0 0.0
    %1148 = vmatpush1.xpose.msra.mxu0 %v963
    %1149 = vmatprep.subr.mxu0 0.0
    %1150 = vmatpush1.xpose.msra.mxu0 %v966
    %1151 = vmatprep.subr.mxu0 0.0
    %1152 = vmatpush1.xpose.msra.mxu0 %v969
    %1153 = vmatprep.subr.mxu0 0.0
    %1154 = vmatpush1.xpose.msra.mxu0 %v972
    %1155 = vmatprep.subr.mxu0 0.0
    %1156 = vmatpush1.xpose.msra.mxu0 %v975
    %1157 = vmatprep.subr.mxu0 0.0
    %1158 = vmatpush1.xpose.msra.mxu0 %v978
    %1159 = vmatprep.subr.mxu0 0.0
    %1160 = vmatpush1.xpose.msra.mxu0 %v981
    %1161 = vmatprep.subr.mxu0 0.0
    %1162 = vmatpush1.xpose.msra.mxu0 %v984
    %1163 = vmatprep.subr.mxu0 0.0
    %1164 = vmatpush1.xpose.msra.mxu0 %v987
    %1165 = vmatprep.subr.mxu0 0.0
    %1166 = vmatpush1.xpose.msra.mxu0 %v990
    %1167 = vmatprep.subr.mxu0 0.0
    %1168 = vmatpush1.xpose.msra.mxu0 %v993
    %1169 = vmatprep.subr.mxu0 0.0
    %1170 = vmatpush1.xpose.msra.mxu0 %v996
    %1171 = vmatprep.subr.mxu0 0.0
    %1172 = vmatpush1.xpose.msra.mxu0 %v999
    %1173 = vmatprep.subr.mxu0 0.0
    %1174 = vmatpush1.xpose.msra.mxu0 %v1002
    %1175 = vmatprep.subr.mxu0 0.0
    %1176 = vmatpush1.xpose.msra.mxu0 %v1005
    %1177 = vmatprep.subr.mxu0 0.0
    %1178 = vmatpush1.xpose.msra.mxu0 %v1008
    %1179 = vmatprep.subr.mxu0 0.0
    %1180 = vmatpush1.xpose.msra.mxu0 %v1011
    %1181 = vmatprep.subr.mxu0 0.0
    %1182 = vmatpush1.xpose.msra.mxu0 %v1014
    %1183 = vmatprep.subr.mxu0 0.0
    %1184 = vmatpush1.xpose.msra.mxu0 %v1017
    %1185 = vmatprep.subr.mxu0 0.0
    %1186 = vmatpush1.xpose.msra.mxu0 %v1020
    %1187 = vmatprep.subr.mxu0 0.0
    %1188 = vmatpush1.xpose.msra.mxu0 %v1023
    %1189 = vmatprep.subr.mxu0 0.0
    %1190 = vmatpush1.xpose.msra.mxu0 %v1026
    %1191 = vmatprep.subr.mxu0 0.0
    %1192 = vmatpush1.xpose.msra.mxu0 %v1029
    %1193 = vmatprep.subr.mxu0 0.0
    %1194 = vmatpush1.xpose.msra.mxu0 %v1032
    %1195 = vmatprep.subr.mxu0 0.0
    %1196 = vmatpush1.xpose.msra.mxu0 %v1035
    %1197 = vmatprep.mubr.f32.mxu0 0.0
    %1198 = vmatmul.mubr.f32.gmra.mrb[0].mxu0 %v846
    %v1199 = vpop.f32.mrb[0].mxu0
    %v1200 = vadd.f32 0.0, %v1199
    %v1201 = vpop.f32.mrb[0].mxu0
    %v1202 = vadd.f32 0.0, %v1201
    %1203 = vmatprep.mubr.f32.mxu0 0.0
    %1204 = vmatmul.mubr.f32.gmra.mrb[0].mxu0 %v849
    %v1205 = vpop.f32.mrb[0].mxu0
    %v1206 = vadd.f32 0.0, %v1205
    %v1207 = vpop.f32.mrb[0].mxu0
    %v1208 = vadd.f32 0.0, %v1207
    %1209 = vmatprep.mubr.f32.mxu0 0.0
    %1210 = vmatmul.mubr.f32.gmra.mrb[0].mxu0 %v852
    %v1211 = vpop.f32.mrb[0].mxu0
    %v1212 = vadd.f32 0.0, %v1211
    %v1213 = vpop.f32.mrb[0].mxu0
    %v1214 = vadd.f32 0.0, %v1213
    %1215 = vmatprep.mubr.f32.mxu0 0.0
    %1216 = vmatmul.mubr.f32.gmra.mrb[0].mxu0 %v855
    %v1217 = vpop.f32.mrb[0].mxu0
    %v1218 = vadd.f32 0.0, %v1217
    %v1219 = vpop.f32.mrb[0].mxu0
    %v1220 = vadd.f32 0.0, %v1219
    %1221 = vmatprep.mubr.f32.mxu0 0.0
    %1222 = vmatmul.mubr.f32.gmra.mrb[0].mxu0 %v858
    %v1223 = vpop.f32.mrb[0].mxu0
    %v1224 = vadd.f32 0.0, %v1223
    %v1225 = vpop.f32.mrb[0].mxu0
    %v1226 = vadd.f32 0.0, %v1225
    %1227 = vmatprep.mubr.f32.mxu0 0.0
    %1228 = vmatmul.mubr.f32.gmra.mrb[0].mxu0 %v861
    %v1229 = vpop.f32.mrb[0].mxu0
    %v1230 = vadd.f32 0.0, %v1229
    %v1231 = vpop.f32.mrb[0].mxu0
    %v1232 = vadd.f32 0.0, %v1231
    %1233 = vmatprep.mubr.f32.mxu0 0.0
    %1234 = vmatmul.mubr.f32.gmra.mrb[0].mxu0 %v864
    %v1235 = vpop.f32.mrb[0].mxu0
    %v1236 = vadd.f32 0.0, %v1235
    %v1237 = vpop.f32.mrb[0].mxu0
    %v1238 = vadd.f32 0.0, %v1237
    %1239 = vmatprep.mubr.f32.mxu0 0.0
    %1240 = vmatmul.mubr.f32.gmra.mrb[0].mxu0 %v867
    %v1241 = vpop.f32.mrb[0].mxu0
    %v1242 = vadd.f32 0.0, %v1241
    %v1243 = vpop.f32.mrb[0].mxu0
    %v1244 = vadd.f32 0.0, %v1243
    %1245 = vmatprep.mubr.f32.mxu0 0.0
    %1246 = vmatmul.mubr.f32.gmra.mrb[0].mxu0 %v870
    %v1247 = vpop.f32.mrb[0].mxu0
    %v1248 = vadd.f32 0.0, %v1247
    %v1249 = vpop.f32.mrb[0].mxu0
    %v1250 = vadd.f32 0.0, %v1249
    %1251 = vmatprep.mubr.f32.mxu0 0.0
    %1252 = vmatmul.mubr.f32.gmra.mrb[0].mxu0 %v873
    %v1253 = vpop.f32.mrb[0].mxu0
    %v1254 = vadd.f32 0.0, %v1253
    %v1255 = vpop.f32.mrb[0].mxu0
    %v1256 = vadd.f32 0.0, %v1255
    %1257 = vmatprep.mubr.f32.mxu0 0.0
    %1258 = vmatmul.mubr.f32.gmra.mrb[0].mxu0 %v876
    %v1259 = vpop.f32.mrb[0].mxu0
    %v1260 = vadd.f32 0.0, %v1259
    %v1261 = vpop.f32.mrb[0].mxu0
    %v1262 = vadd.f32 0.0, %v1261
    %1263 = vmatprep.mubr.f32.mxu0 0.0
    %1264 = vmatmul.mubr.f32.gmra.mrb[0].mxu0 %v879
    %v1265 = vpop.f32.mrb[0].mxu0
    %v1266 = vadd.f32 0.0, %v1265
    %v1267 = vpop.f32.mrb[0].mxu0
    %v1268 = vadd.f32 0.0, %v1267
    %1269 = vmatprep.mubr.f32.mxu0 0.0
    %1270 = vmatmul.mubr.f32.gmra.mrb[0].mxu0 %v882
    %v1271 = vpop.f32.mrb[0].mxu0
    %v1272 = vadd.f32 0.0, %v1271
    %v1273 = vpop.f32.mrb[0].mxu0
    %v1274 = vadd.f32 0.0, %v1273
    %1275 = vmatprep.mubr.f32.mxu0 0.0
    %1276 = vmatmul.mubr.f32.gmra.mrb[0].mxu0 %v885
    %v1277 = vpop.f32.mrb[0].mxu0
    %v1278 = vadd.f32 0.0, %v1277
    %v1279 = vpop.f32.mrb[0].mxu0
    %v1280 = vadd.f32 0.0, %v1279
    %1281 = vmatprep.mubr.f32.mxu0 0.0
    %1282 = vmatmul.mubr.f32.gmra.mrb[0].mxu0 %v888
    %v1283 = vpop.f32.mrb[0].mxu0
    %v1284 = vadd.f32 0.0, %v1283
    %v1285 = vpop.f32.mrb[0].mxu0
    %v1286 = vadd.f32 0.0, %v1285
    %1287 = vmatprep.mubr.f32.mxu0 0.0
    %1288 = vmatmul.mubr.f32.gmra.mrb[0].mxu0 %v891
    %v1289 = vpop.f32.mrb[0].mxu0
    %v1290 = vadd.f32 0.0, %v1289
    %v1291 = vpop.f32.mrb[0].mxu0
    %v1292 = vadd.f32 0.0, %v1291
    %1293 = vmatprep.mubr.f32.mxu0 0.0
    %1294 = vmatmul.mubr.f32.gmra.mrb[0].mxu0 %v894
    %v1295 = vpop.f32.mrb[0].mxu0
    %v1296 = vadd.f32 0.0, %v1295
    %v1297 = vpop.f32.mrb[0].mxu0
    %v1298 = vadd.f32 0.0, %v1297
    %1299 = vmatprep.mubr.f32.mxu0 0.0
    %1300 = vmatmul.mubr.f32.gmra.mrb[0].mxu0 %v897
    %v1301 = vpop.f32.mrb[0].mxu0
    %v1302 = vadd.f32 0.0, %v1301
    %v1303 = vpop.f32.mrb[0].mxu0
    %v1304 = vadd.f32 0.0, %v1303
    %1305 = vmatprep.mubr.f32.mxu0 0.0
    %1306 = vmatmul.mubr.f32.gmra.mrb[0].mxu0 %v900
    %v1307 = vpop.f32.mrb[0].mxu0
    %v1308 = vadd.f32 0.0, %v1307
    %v1309 = vpop.f32.mrb[0].mxu0
    %v1310 = vadd.f32 0.0, %v1309
    %1311 = vmatprep.mubr.f32.mxu0 0.0
    %1312 = vmatmul.mubr.f32.gmra.mrb[0].mxu0 %v903
    %v1313 = vpop.f32.mrb[0].mxu0
    %v1314 = vadd.f32 0.0, %v1313
    %v1315 = vpop.f32.mrb[0].mxu0
    %v1316 = vadd.f32 0.0, %v1315
    %1317 = vmatprep.mubr.f32.mxu0 0.0
    %1318 = vmatmul.mubr.f32.gmra.mrb[0].mxu0 %v906
    %v1319 = vpop.f32.mrb[0].mxu0
    %v1320 = vadd.f32 0.0, %v1319
    %v1321 = vpop.f32.mrb[0].mxu0
    %v1322 = vadd.f32 0.0, %v1321
    %1323 = vmatprep.mubr.f32.mxu0 0.0
    %1324 = vmatmul.mubr.f32.gmra.mrb[0].mxu0 %v909
    %v1325 = vpop.f32.mrb[0].mxu0
    %v1326 = vadd.f32 0.0, %v1325
    %v1327 = vpop.f32.mrb[0].mxu0
    %v1328 = vadd.f32 0.0, %v1327
    %1329 = vmatprep.mubr.f32.mxu0 0.0
    %1330 = vmatmul.mubr.f32.gmra.mrb[0].mxu0 %v912
    %v1331 = vpop.f32.mrb[0].mxu0
    %v1332 = vadd.f32 0.0, %v1331
    %v1333 = vpop.f32.mrb[0].mxu0
    %v1334 = vadd.f32 0.0, %v1333
    %1335 = vmatprep.mubr.f32.mxu0 0.0
    %1336 = vmatmul.mubr.f32.gmra.mrb[0].mxu0 %v915
    %v1337 = vpop.f32.mrb[0].mxu0
    %v1338 = vadd.f32 0.0, %v1337
    %v1339 = vpop.f32.mrb[0].mxu0
    %v1340 = vadd.f32 0.0, %v1339
    %1341 = vmatprep.mubr.f32.mxu0 0.0
    %1342 = vmatmul.mubr.f32.gmra.mrb[0].mxu0 %v918
    %v1343 = vpop.f32.mrb[0].mxu0
    %v1344 = vadd.f32 0.0, %v1343
    %v1345 = vpop.f32.mrb[0].mxu0
    %v1346 = vadd.f32 0.0, %v1345
    %1347 = vmatprep.mubr.f32.mxu0 0.0
    %1348 = vmatmul.mubr.f32.gmra.mrb[0].mxu0 %v921
    %v1349 = vpop.f32.mrb[0].mxu0
    %v1350 = vadd.f32 0.0, %v1349
    %v1351 = vpop.f32.mrb[0].mxu0
    %v1352 = vadd.f32 0.0, %v1351
    %1353 = vmatprep.mubr.f32.mxu0 0.0
    %1354 = vmatmul.mubr.f32.gmra.mrb[0].mxu0 %v924
    %v1355 = vpop.f32.mrb[0].mxu0
    %v1356 = vadd.f32 0.0, %v1355
    %v1357 = vpop.f32.mrb[0].mxu0
    %v1358 = vadd.f32 0.0, %v1357
    %1359 = vmatprep.mubr.f32.mxu0 0.0
    %1360 = vmatmul.mubr.f32.gmra.mrb[0].mxu0 %v927
    %v1361 = vpop.f32.mrb[0].mxu0
    %v1362 = vadd.f32 0.0, %v1361
    %v1363 = vpop.f32.mrb[0].mxu0
    %v1364 = vadd.f32 0.0, %v1363
    %1365 = vmatprep.mubr.f32.mxu0 0.0
    %1366 = vmatmul.mubr.f32.gmra.mrb[0].mxu0 %v930
    %v1367 = vpop.f32.mrb[0].mxu0
    %v1368 = vadd.f32 0.0, %v1367
    %v1369 = vpop.f32.mrb[0].mxu0
    %v1370 = vadd.f32 0.0, %v1369
    %1371 = vmatprep.mubr.f32.mxu0 0.0
    %1372 = vmatmul.mubr.f32.gmra.mrb[0].mxu0 %v933
    %v1373 = vpop.f32.mrb[0].mxu0
    %v1374 = vadd.f32 0.0, %v1373
    %v1375 = vpop.f32.mrb[0].mxu0
    %v1376 = vadd.f32 0.0, %v1375
    %1377 = vmatprep.mubr.f32.mxu0 0.0
    %1378 = vmatmul.mubr.f32.gmra.mrb[0].mxu0 %v936
    %v1379 = vpop.f32.mrb[0].mxu0
    %v1380 = vadd.f32 0.0, %v1379
    %v1381 = vpop.f32.mrb[0].mxu0
    %v1382 = vadd.f32 0.0, %v1381
    %1383 = vmatprep.mubr.f32.mxu0 0.0
    %1384 = vmatmul.mubr.f32.gmra.mrb[0].mxu0 %v939
    %v1385 = vpop.f32.mrb[0].mxu0
    %v1386 = vadd.f32 0.0, %v1385
    %v1387 = vpop.f32.mrb[0].mxu0
    %v1388 = vadd.f32 0.0, %v1387
    %1389 = vdwg.mxu0
    %1390 = vmatprep.subr.mxu0 0.0
    %1391 = vmatpush1.xpose.msra.mxu0 %v1038
    %1392 = vmatprep.subr.mxu0 0.0
    %1393 = vmatpush1.xpose.msra.mxu0 %v1041
    %1394 = vmatprep.subr.mxu0 0.0
    %1395 = vmatpush1.xpose.msra.mxu0 %v1044
    %1396 = vmatprep.subr.mxu0 0.0
    %1397 = vmatpush1.xpose.msra.mxu0 %v1047
    %1398 = vmatprep.subr.mxu0 0.0
    %1399 = vmatpush1.xpose.msra.mxu0 %v1050
    %1400 = vmatprep.subr.mxu0 0.0
    %1401 = vmatpush1.xpose.msra.mxu0 %v1053
    %1402 = vmatprep.subr.mxu0 0.0
    %1403 = vmatpush1.xpose.msra.mxu0 %v1056
    %1404 = vmatprep.subr.mxu0 0.0
    %1405 = vmatpush1.xpose.msra.mxu0 %v1059
    %1406 = vmatprep.subr.mxu0 0.0
    %1407 = vmatpush1.xpose.msra.mxu0 %v1062
    %1408 = vmatprep.subr.mxu0 0.0
    %1409 = vmatpush1.xpose.msra.mxu0 %v1065
    %1410 = vmatprep.subr.mxu0 0.0
    %1411 = vmatpush1.xpose.msra.mxu0 %v1068
    %1412 = vmatprep.subr.mxu0 0.0
    %1413 = vmatpush1.xpose.msra.mxu0 %v1071
    %1414 = vmatprep.subr.mxu0 0.0
    %1415 = vmatpush1.xpose.msra.mxu0 %v1074
    %1416 = vmatprep.subr.mxu0 0.0
    %1417 = vmatpush1.xpose.msra.mxu0 %v1077
    %1418 = vmatprep.subr.mxu0 0.0
    %1419 = vmatpush1.xpose.msra.mxu0 %v1080
    %1420 = vmatprep.subr.mxu0 0.0
    %1421 = vmatpush1.xpose.msra.mxu0 %v1083
    %1422 = vmatprep.subr.mxu0 0.0
    %1423 = vmatpush1.xpose.msra.mxu0 %v1086
    %1424 = vmatprep.subr.mxu0 0.0
    %1425 = vmatpush1.xpose.msra.mxu0 %v1089
    %1426 = vmatprep.subr.mxu0 0.0
    %1427 = vmatpush1.xpose.msra.mxu0 %v1092
    %1428 = vmatprep.subr.mxu0 0.0
    %1429 = vmatpush1.xpose.msra.mxu0 %v1095
    %1430 = vmatprep.subr.mxu0 0.0
    %1431 = vmatpush1.xpose.msra.mxu0 %v1098
    %1432 = vmatprep.subr.mxu0 0.0
    %1433 = vmatpush1.xpose.msra.mxu0 %v1101
    %1434 = vmatprep.subr.mxu0 0.0
    %1435 = vmatpush1.xpose.msra.mxu0 %v1104
    %1436 = vmatprep.subr.mxu0 0.0
    %1437 = vmatpush1.xpose.msra.mxu0 %v1107
    %1438 = vmatprep.subr.mxu0 0.0
    %1439 = vmatpush1.xpose.msra.mxu0 %v1110
    %1440 = vmatprep.subr.mxu0 0.0
    %1441 = vmatpush1.xpose.msra.mxu0 %v1113
    %1442 = vmatprep.subr.mxu0 0.0
    %1443 = vmatpush1.xpose.msra.mxu0 %v1116
    %1444 = vmatprep.subr.mxu0 0.0
    %1445 = vmatpush1.xpose.msra.mxu0 %v1119
    %1446 = vmatprep.subr.mxu0 0.0
    %1447 = vmatpush1.xpose.msra.mxu0 %v1122
    %1448 = vmatprep.subr.mxu0 0.0
    %1449 = vmatpush1.xpose.msra.mxu0 %v1125
    %1450 = vmatprep.subr.mxu0 0.0
    %1451 = vmatpush1.xpose.msra.mxu0 %v1128
    %1452 = vmatprep.subr.mxu0 0.0
    %1453 = vmatpush1.xpose.msra.mxu0 %v1131
    %1454 = vmatprep.mubr.f32.mxu0 0.0
    %1455 = vmatmul.mubr.f32.gmra.mrb[0].mxu0 %v846
    %v1456 = vpop.f32.mrb[0].mxu0
    %v1457 = vadd.f32 0.0, %v1456
    %v1458 = vpop.f32.mrb[0].mxu0
    %v1459 = vadd.f32 0.0, %v1458
    %1460 = vmatprep.mubr.f32.mxu0 0.0
    %1461 = vmatmul.mubr.f32.gmra.mrb[0].mxu0 %v849
    %v1462 = vpop.f32.mrb[0].mxu0
    %v1463 = vadd.f32 0.0, %v1462
    %v1464 = vpop.f32.mrb[0].mxu0
    %v1465 = vadd.f32 0.0, %v1464
    %1466 = vmatprep.mubr.f32.mxu0 0.0
    %1467 = vmatmul.mubr.f32.gmra.mrb[0].mxu0 %v852
    %v1468 = vpop.f32.mrb[0].mxu0
    %v1469 = vadd.f32 0.0, %v1468
    %v1470 = vpop.f32.mrb[0].mxu0
    %v1471 = vadd.f32 0.0, %v1470
    %1472 = vmatprep.mubr.f32.mxu0 0.0
    %1473 = vmatmul.mubr.f32.gmra.mrb[0].mxu0 %v855
    %v1474 = vpop.f32.mrb[0].mxu0
    %v1475 = vadd.f32 0.0, %v1474
    %v1476 = vpop.f32.mrb[0].mxu0
    %v1477 = vadd.f32 0.0, %v1476
    %1478 = vmatprep.mubr.f32.mxu0 0.0
    %1479 = vmatmul.mubr.f32.gmra.mrb[0].mxu0 %v858
    %v1480 = vpop.f32.mrb[0].mxu0
    %v1481 = vadd.f32 0.0, %v1480
    %v1482 = vpop.f32.mrb[0].mxu0
    %v1483 = vadd.f32 0.0, %v1482
    %1484 = vmatprep.mubr.f32.mxu0 0.0
    %1485 = vmatmul.mubr.f32.gmra.mrb[0].mxu0 %v861
    %v1486 = vpop.f32.mrb[0].mxu0
    %v1487 = vadd.f32 0.0, %v1486
    %v1488 = vpop.f32.mrb[0].mxu0
    %v1489 = vadd.f32 0.0, %v1488
    %1490 = vmatprep.mubr.f32.mxu0 0.0
    %1491 = vmatmul.mubr.f32.gmra.mrb[0].mxu0 %v864
    %v1492 = vpop.f32.mrb[0].mxu0
    %v1493 = vadd.f32 0.0, %v1492
    %v1494 = vpop.f32.mrb[0].mxu0
    %v1495 = vadd.f32 0.0, %v1494
    %1496 = vmatprep.mubr.f32.mxu0 0.0
    %1497 = vmatmul.mubr.f32.gmra.mrb[0].mxu0 %v867
    %v1498 = vpop.f32.mrb[0].mxu0
    %v1499 = vadd.f32 0.0, %v1498
    %v1500 = vpop.f32.mrb[0].mxu0
    %v1501 = vadd.f32 0.0, %v1500
    %1502 = vmatprep.mubr.f32.mxu0 0.0
    %1503 = vmatmul.mubr.f32.gmra.mrb[0].mxu0 %v870
    %v1504 = vpop.f32.mrb[0].mxu0
    %v1505 = vadd.f32 0.0, %v1504
    %v1506 = vpop.f32.mrb[0].mxu0
    %v1507 = vadd.f32 0.0, %v1506
    %1508 = vmatprep.mubr.f32.mxu0 0.0
    %1509 = vmatmul.mubr.f32.gmra.mrb[0].mxu0 %v873
    %v1510 = vpop.f32.mrb[0].mxu0
    %v1511 = vadd.f32 0.0, %v1510
    %v1512 = vpop.f32.mrb[0].mxu0
    %v1513 = vadd.f32 0.0, %v1512
    %1514 = vmatprep.mubr.f32.mxu0 0.0
    %1515 = vmatmul.mubr.f32.gmra.mrb[0].mxu0 %v876
    %v1516 = vpop.f32.mrb[0].mxu0
    %v1517 = vadd.f32 0.0, %v1516
    %v1518 = vpop.f32.mrb[0].mxu0
    %v1519 = vadd.f32 0.0, %v1518
    %1520 = vmatprep.mubr.f32.mxu0 0.0
    %1521 = vmatmul.mubr.f32.gmra.mrb[0].mxu0 %v879
    %v1522 = vpop.f32.mrb[0].mxu0
    %v1523 = vadd.f32 0.0, %v1522
    %v1524 = vpop.f32.mrb[0].mxu0
    %v1525 = vadd.f32 0.0, %v1524
    %1526 = vmatprep.mubr.f32.mxu0 0.0
    %1527 = vmatmul.mubr.f32.gmra.mrb[0].mxu0 %v882
    %v1528 = vpop.f32.mrb[0].mxu0
    %v1529 = vadd.f32 0.0, %v1528
    %v1530 = vpop.f32.mrb[0].mxu0
    %v1531 = vadd.f32 0.0, %v1530
    %1532 = vmatprep.mubr.f32.mxu0 0.0
    %1533 = vmatmul.mubr.f32.gmra.mrb[0].mxu0 %v885
    %v1534 = vpop.f32.mrb[0].mxu0
    %v1535 = vadd.f32 0.0, %v1534
    %v1536 = vpop.f32.mrb[0].mxu0
    %v1537 = vadd.f32 0.0, %v1536
    %1538 = vmatprep.mubr.f32.mxu0 0.0
    %1539 = vmatmul.mubr.f32.gmra.mrb[0].mxu0 %v888
    %v1540 = vpop.f32.mrb[0].mxu0
    %v1541 = vadd.f32 0.0, %v1540
    %v1542 = vpop.f32.mrb[0].mxu0
    %v1543 = vadd.f32 0.0, %v1542
    %1544 = vmatprep.mubr.f32.mxu0 0.0
    %1545 = vmatmul.mubr.f32.gmra.mrb[0].mxu0 %v891
    %v1546 = vpop.f32.mrb[0].mxu0
    %v1547 = vadd.f32 0.0, %v1546
    %v1548 = vpop.f32.mrb[0].mxu0
    %v1549 = vadd.f32 0.0, %v1548
    %1550 = vmatprep.mubr.f32.mxu0 0.0
    %1551 = vmatmul.mubr.f32.gmra.mrb[0].mxu0 %v894
    %v1552 = vpop.f32.mrb[0].mxu0
    %v1553 = vadd.f32 0.0, %v1552
    %v1554 = vpop.f32.mrb[0].mxu0
    %v1555 = vadd.f32 0.0, %v1554
    %1556 = vmatprep.mubr.f32.mxu0 0.0
    %1557 = vmatmul.mubr.f32.gmra.mrb[0].mxu0 %v897
    %v1558 = vpop.f32.mrb[0].mxu0
    %v1559 = vadd.f32 0.0, %v1558
    %v1560 = vpop.f32.mrb[0].mxu0
    %v1561 = vadd.f32 0.0, %v1560
    %1562 = vmatprep.mubr.f32.mxu0 0.0
    %1563 = vmatmul.mubr.f32.gmra.mrb[0].mxu0 %v900
    %v1564 = vpop.f32.mrb[0].mxu0
    %v1565 = vadd.f32 0.0, %v1564
    %v1566 = vpop.f32.mrb[0].mxu0
    %v1567 = vadd.f32 0.0, %v1566
    %1568 = vmatprep.mubr.f32.mxu0 0.0
    %1569 = vmatmul.mubr.f32.gmra.mrb[0].mxu0 %v903
    %v1570 = vpop.f32.mrb[0].mxu0
    %v1571 = vadd.f32 0.0, %v1570
    %v1572 = vpop.f32.mrb[0].mxu0
    %v1573 = vadd.f32 0.0, %v1572
    %1574 = vmatprep.mubr.f32.mxu0 0.0
    %1575 = vmatmul.mubr.f32.gmra.mrb[0].mxu0 %v906
    %v1576 = vpop.f32.mrb[0].mxu0
    %v1577 = vadd.f32 0.0, %v1576
    %v1578 = vpop.f32.mrb[0].mxu0
    %v1579 = vadd.f32 0.0, %v1578
    %1580 = vmatprep.mubr.f32.mxu0 0.0
    %1581 = vmatmul.mubr.f32.gmra.mrb[0].mxu0 %v909
    %v1582 = vpop.f32.mrb[0].mxu0
    %v1583 = vadd.f32 0.0, %v1582
    %v1584 = vpop.f32.mrb[0].mxu0
    %v1585 = vadd.f32 0.0, %v1584
    %1586 = vmatprep.mubr.f32.mxu0 0.0
    %1587 = vmatmul.mubr.f32.gmra.mrb[0].mxu0 %v912
    %v1588 = vpop.f32.mrb[0].mxu0
    %v1589 = vadd.f32 0.0, %v1588
    %v1590 = vpop.f32.mrb[0].mxu0
    %v1591 = vadd.f32 0.0, %v1590
    %1592 = vmatprep.mubr.f32.mxu0 0.0
    %1593 = vmatmul.mubr.f32.gmra.mrb[0].mxu0 %v915
    %v1594 = vpop.f32.mrb[0].mxu0
    %v1595 = vadd.f32 0.0, %v1594
    %v1596 = vpop.f32.mrb[0].mxu0
    %v1597 = vadd.f32 0.0, %v1596
    %1598 = vmatprep.mubr.f32.mxu0 0.0
    %1599 = vmatmul.mubr.f32.gmra.mrb[0].mxu0 %v918
    %v1600 = vpop.f32.mrb[0].mxu0
    %v1601 = vadd.f32 0.0, %v1600
    %v1602 = vpop.f32.mrb[0].mxu0
    %v1603 = vadd.f32 0.0, %v1602
    %1604 = vmatprep.mubr.f32.mxu0 0.0
    %1605 = vmatmul.mubr.f32.gmra.mrb[0].mxu0 %v921
    %v1606 = vpop.f32.mrb[0].mxu0
    %v1607 = vadd.f32 0.0, %v1606
    %v1608 = vpop.f32.mrb[0].mxu0
    %v1609 = vadd.f32 0.0, %v1608
    %1610 = vmatprep.mubr.f32.mxu0 0.0
    %1611 = vmatmul.mubr.f32.gmra.mrb[0].mxu0 %v924
    %v1612 = vpop.f32.mrb[0].mxu0
    %v1613 = vadd.f32 0.0, %v1612
    %v1614 = vpop.f32.mrb[0].mxu0
    %v1615 = vadd.f32 0.0, %v1614
    %1616 = vmatprep.mubr.f32.mxu0 0.0
    %1617 = vmatmul.mubr.f32.gmra.mrb[0].mxu0 %v927
    %v1618 = vpop.f32.mrb[0].mxu0
    %v1619 = vadd.f32 0.0, %v1618
    %v1620 = vpop.f32.mrb[0].mxu0
    %v1621 = vadd.f32 0.0, %v1620
    %1622 = vmatprep.mubr.f32.mxu0 0.0
    %1623 = vmatmul.mubr.f32.gmra.mrb[0].mxu0 %v930
    %v1624 = vpop.f32.mrb[0].mxu0
    %v1625 = vadd.f32 0.0, %v1624
    %v1626 = vpop.f32.mrb[0].mxu0
    %v1627 = vadd.f32 0.0, %v1626
    %1628 = vmatprep.mubr.f32.mxu0 0.0
    %1629 = vmatmul.mubr.f32.gmra.mrb[0].mxu0 %v933
    %v1630 = vpop.f32.mrb[0].mxu0
    %v1631 = vadd.f32 0.0, %v1630
    %v1632 = vpop.f32.mrb[0].mxu0
    %v1633 = vadd.f32 0.0, %v1632
    %1634 = vmatprep.mubr.f32.mxu0 0.0
    %1635 = vmatmul.mubr.f32.gmra.mrb[0].mxu0 %v936
    %v1636 = vpop.f32.mrb[0].mxu0
    %v1637 = vadd.f32 0.0, %v1636
    %v1638 = vpop.f32.mrb[0].mxu0
    %v1639 = vadd.f32 0.0, %v1638
    %1640 = vmatprep.mubr.f32.mxu0 0.0
    %1641 = vmatmul.mubr.f32.gmra.mrb[0].mxu0 %v939
    %v1642 = vpop.f32.mrb[0].mxu0
    %v1643 = vadd.f32 0.0, %v1642
    %v1644 = vpop.f32.mrb[0].mxu0
    %v1645 = vadd.f32 0.0, %v1644
    %1646 = vdwg.mxu0
    %v1647 = vld [vmem:[#allocation2] sm:$0xff]
    %v1648 = vld [vmem:[#allocation2 + $0x8] sm:$0xff]
    %v1649 = vld [vmem:[#allocation2 + $0x10] sm:$0xff]
    %v1650 = vld [vmem:[#allocation2 + $0x18] sm:$0xff]
    %v1651 = vld [vmem:[#allocation2 + $0x20] sm:$0xff]
    %v1652 = vld [vmem:[#allocation2 + $0x28] sm:$0xff]
    %v1653 = vld [vmem:[#allocation2 + $0x30] sm:$0xff]
    %v1654 = vld [vmem:[#allocation2 + $0x38] sm:$0xff]
    %v1655 = vld [vmem:[#allocation2 + $0x40] sm:$0xff]
    %v1656 = vld [vmem:[#allocation2 + $0x48] sm:$0xff]
    %v1657 = vld [vmem:[#allocation2 + $0x50] sm:$0xff]
    %v1658 = vld [vmem:[#allocation2 + $0x58] sm:$0xff]
    %v1659 = vld [vmem:[#allocation2 + $0x60] sm:$0xff]
    %v1660 = vld [vmem:[#allocation2 + $0x68] sm:$0xff]
    %v1661 = vld [vmem:[#allocation2 + $0x70] sm:$0xff]
    %v1662 = vld [vmem:[#allocation2 + $0x78] sm:$0xff]
    %v1663 = vld [vmem:[#allocation2 + $0x80] sm:$0xff]
    %v1664 = vld [vmem:[#allocation2 + $0x88] sm:$0xff]
    %v1665 = vld [vmem:[#allocation2 + $0x90] sm:$0xff]
    %v1666 = vld [vmem:[#allocation2 + $0x98] sm:$0xff]
    %v1667 = vld [vmem:[#allocation2 + $0xa0] sm:$0xff]
    %v1668 = vld [vmem:[#allocation2 + $0xa8] sm:$0xff]
    %v1669 = vld [vmem:[#allocation2 + $0xb0] sm:$0xff]
    %v1670 = vld [vmem:[#allocation2 + $0xb8] sm:$0xff]
    %v1671 = vld [vmem:[#allocation2 + $0xc0] sm:$0xff]
    %v1672 = vld [vmem:[#allocation2 + $0xc8] sm:$0xff]
    %v1673 = vld [vmem:[#allocation2 + $0xd0] sm:$0xff]
    %v1674 = vld [vmem:[#allocation2 + $0xd8] sm:$0xff]
    %v1675 = vld [vmem:[#allocation2 + $0xe0] sm:$0xff]
    %v1676 = vld [vmem:[#allocation2 + $0xe8] sm:$0xff]
    %v1677 = vld [vmem:[#allocation2 + $0xf0] sm:$0xff]
    %v1678 = vld [vmem:[#allocation2 + $0xf8] sm:$0xff]
    %1680 = vset.pattern.permute.xlu0 0
    %1681 = vperm.xlu0 %1680, %v1647
    %v1682 = vpop.permute.xlu0 %1681
    %1685 = vset.pattern.permute.xlu0 0
    %1686 = vperm.xlu0 %1685, %v1648
    %v1687 = vpop.permute.xlu0 %1686
    %1690 = vset.pattern.permute.xlu0 0
    %1691 = vperm.xlu0 %1690, %v1649
    %v1692 = vpop.permute.xlu0 %1691
    %1695 = vset.pattern.permute.xlu0 0
    %1696 = vperm.xlu0 %1695, %v1650
    %v1697 = vpop.permute.xlu0 %1696
    %1700 = vset.pattern.permute.xlu0 0
    %1701 = vperm.xlu0 %1700, %v1651
    %v1702 = vpop.permute.xlu0 %1701
    %1705 = vset.pattern.permute.xlu0 0
    %1706 = vperm.xlu0 %1705, %v1652
    %v1707 = vpop.permute.xlu0 %1706
    %1710 = vset.pattern.permute.xlu0 0
    %1711 = vperm.xlu0 %1710, %v1653
    %v1712 = vpop.permute.xlu0 %1711
    %1715 = vset.pattern.permute.xlu0 0
    %1716 = vperm.xlu0 %1715, %v1654
    %v1717 = vpop.permute.xlu0 %1716
    %1720 = vset.pattern.permute.xlu0 0
    %1721 = vperm.xlu0 %1720, %v1655
    %v1722 = vpop.permute.xlu0 %1721
    %1725 = vset.pattern.permute.xlu0 0
    %1726 = vperm.xlu0 %1725, %v1656
    %v1727 = vpop.permute.xlu0 %1726
    %1730 = vset.pattern.permute.xlu0 0
    %1731 = vperm.xlu0 %1730, %v1657
    %v1732 = vpop.permute.xlu0 %1731
    %1735 = vset.pattern.permute.xlu0 0
    %1736 = vperm.xlu0 %1735, %v1658
    %v1737 = vpop.permute.xlu0 %1736
    %1740 = vset.pattern.permute.xlu0 0
    %1741 = vperm.xlu0 %1740, %v1659
    %v1742 = vpop.permute.xlu0 %1741
    %1745 = vset.pattern.permute.xlu0 0
    %1746 = vperm.xlu0 %1745, %v1660
    %v1747 = vpop.permute.xlu0 %1746
    %1750 = vset.pattern.permute.xlu0 0
    %1751 = vperm.xlu0 %1750, %v1661
    %v1752 = vpop.permute.xlu0 %1751
    %1755 = vset.pattern.permute.xlu0 0
    %1756 = vperm.xlu0 %1755, %v1662
    %v1757 = vpop.permute.xlu0 %1756
    %1760 = vset.pattern.permute.xlu0 0
    %1761 = vperm.xlu0 %1760, %v1663
    %v1762 = vpop.permute.xlu0 %1761
    %1765 = vset.pattern.permute.xlu0 0
    %1766 = vperm.xlu0 %1765, %v1664
    %v1767 = vpop.permute.xlu0 %1766
    %1770 = vset.pattern.permute.xlu0 0
    %1771 = vperm.xlu0 %1770, %v1665
    %v1772 = vpop.permute.xlu0 %1771
    %1775 = vset.pattern.permute.xlu0 0
    %1776 = vperm.xlu0 %1775, %v1666
    %v1777 = vpop.permute.xlu0 %1776
    %1780 = vset.pattern.permute.xlu0 0
    %1781 = vperm.xlu0 %1780, %v1667
    %v1782 = vpop.permute.xlu0 %1781
    %1785 = vset.pattern.permute.xlu0 0
    %1786 = vperm.xlu0 %1785, %v1668
    %v1787 = vpop.permute.xlu0 %1786
    %1790 = vset.pattern.permute.xlu0 0
    %1791 = vperm.xlu0 %1790, %v1669
    %v1792 = vpop.permute.xlu0 %1791
    %1795 = vset.pattern.permute.xlu0 0
    %1796 = vperm.xlu0 %1795, %v1670
    %v1797 = vpop.permute.xlu0 %1796
    %1800 = vset.pattern.permute.xlu0 0
    %1801 = vperm.xlu0 %1800, %v1671
    %v1802 = vpop.permute.xlu0 %1801
    %1805 = vset.pattern.permute.xlu0 0
    %1806 = vperm.xlu0 %1805, %v1672
    %v1807 = vpop.permute.xlu0 %1806
    %1810 = vset.pattern.permute.xlu0 0
    %1811 = vperm.xlu0 %1810, %v1673
    %v1812 = vpop.permute.xlu0 %1811
    %1815 = vset.pattern.permute.xlu0 0
    %1816 = vperm.xlu0 %1815, %v1674
    %v1817 = vpop.permute.xlu0 %1816
    %1820 = vset.pattern.permute.xlu0 0
    %1821 = vperm.xlu0 %1820, %v1675
    %v1822 = vpop.permute.xlu0 %1821
    %1825 = vset.pattern.permute.xlu0 0
    %1826 = vperm.xlu0 %1825, %v1676
    %v1827 = vpop.permute.xlu0 %1826
    %1830 = vset.pattern.permute.xlu0 0
    %1831 = vperm.xlu0 %1830, %v1677
    %v1832 = vpop.permute.xlu0 %1831
    %1835 = vset.pattern.permute.xlu0 0
    %1836 = vperm.xlu0 %1835, %v1678
    %v1837 = vpop.permute.xlu0 %1836
    %v1839 = vlaneseq
    %v1840 = vshrl.u32 %v1839, 7
    %v1841 = vsub.s32 0, %v1840
    %v1842 = vrot.slane %v701, %v1841
    %v1843 = vlaneseq
    %v1844 = vshrl.u32 %v1843, 7
    %v1845 = vsub.s32 0, %v1844
    %v1846 = vrot.slane %v733, %v1845
    %v1847 = vlaneseq
    %v1848 = vshrl.u32 %v1847, 7
    %v1849 = vsub.s32 0, %v1848
    %v1850 = vrot.slane %v765, %v1849
    %v1851 = vlaneseq
    %v1852 = vshrl.u32 %v1851, 7
    %v1853 = vsub.s32 0, %v1852
    %v1854 = vrot.slane %v797, %v1853
    %v1855 = vadd.f32 %v1682, %v1842
    %v1856 = vadd.f32 %v1682, %v1846
    %v1857 = vadd.f32 %v1682, %v1850
    %v1858 = vadd.f32 %v1682, %v1854
    %v1859 = vadd.f32 %v1687, %v1842
    %v1860 = vadd.f32 %v1687, %v1846
    %v1861 = vadd.f32 %v1687, %v1850
    %v1862 = vadd.f32 %v1687, %v1854
    %v1863 = vadd.f32 %v1692, %v1842
    %v1864 = vadd.f32 %v1692, %v1846
    %v1865 = vadd.f32 %v1692, %v1850
    %v1866 = vadd.f32 %v1692, %v1854
    %v1867 = vadd.f32 %v1697, %v1842
    %v1868 = vadd.f32 %v1697, %v1846
    %v1869 = vadd.f32 %v1697, %v1850
    %v1870 = vadd.f32 %v1697, %v1854
    %v1871 = vadd.f32 %v1702, %v1842
    %v1872 = vadd.f32 %v1702, %v1846
    %v1873 = vadd.f32 %v1702, %v1850
    %v1874 = vadd.f32 %v1702, %v1854
    %v1875 = vadd.f32 %v1707, %v1842
    %v1876 = vadd.f32 %v1707, %v1846
    %v1877 = vadd.f32 %v1707, %v1850
    %v1878 = vadd.f32 %v1707, %v1854
    %v1879 = vadd.f32 %v1712, %v1842
    %v1880 = vadd.f32 %v1712, %v1846
    %v1881 = vadd.f32 %v1712, %v1850
    %v1882 = vadd.f32 %v1712, %v1854
    %v1883 = vadd.f32 %v1717, %v1842
    %v1884 = vadd.f32 %v1717, %v1846
    %v1885 = vadd.f32 %v1717, %v1850
    %v1886 = vadd.f32 %v1717, %v1854
    %v1887 = vadd.f32 %v1722, %v1842
    %v1888 = vadd.f32 %v1722, %v1846
    %v1889 = vadd.f32 %v1722, %v1850
    %v1890 = vadd.f32 %v1722, %v1854
    %v1891 = vadd.f32 %v1727, %v1842
    %v1892 = vadd.f32 %v1727, %v1846
    %v1893 = vadd.f32 %v1727, %v1850
    %v1894 = vadd.f32 %v1727, %v1854
    %v1895 = vadd.f32 %v1732, %v1842
    %v1896 = vadd.f32 %v1732, %v1846
    %v1897 = vadd.f32 %v1732, %v1850
    %v1898 = vadd.f32 %v1732, %v1854
    %v1899 = vadd.f32 %v1737, %v1842
    %v1900 = vadd.f32 %v1737, %v1846
    %v1901 = vadd.f32 %v1737, %v1850
    %v1902 = vadd.f32 %v1737, %v1854
    %v1903 = vadd.f32 %v1742, %v1842
    %v1904 = vadd.f32 %v1742, %v1846
    %v1905 = vadd.f32 %v1742, %v1850
    %v1906 = vadd.f32 %v1742, %v1854
    %v1907 = vadd.f32 %v1747, %v1842
    %v1908 = vadd.f32 %v1747, %v1846
    %v1909 = vadd.f32 %v1747, %v1850
    %v1910 = vadd.f32 %v1747, %v1854
    %v1911 = vadd.f32 %v1752, %v1842
    %v1912 = vadd.f32 %v1752, %v1846
    %v1913 = vadd.f32 %v1752, %v1850
    %v1914 = vadd.f32 %v1752, %v1854
    %v1915 = vadd.f32 %v1757, %v1842
    %v1916 = vadd.f32 %v1757, %v1846
    %v1917 = vadd.f32 %v1757, %v1850
    %v1918 = vadd.f32 %v1757, %v1854
    %v1919 = vadd.f32 %v1762, %v1842
    %v1920 = vadd.f32 %v1762, %v1846
    %v1921 = vadd.f32 %v1762, %v1850
    %v1922 = vadd.f32 %v1762, %v1854
    %v1923 = vadd.f32 %v1767, %v1842
    %v1924 = vadd.f32 %v1767, %v1846
    %v1925 = vadd.f32 %v1767, %v1850
    %v1926 = vadd.f32 %v1767, %v1854
    %v1927 = vadd.f32 %v1772, %v1842
    %v1928 = vadd.f32 %v1772, %v1846
    %v1929 = vadd.f32 %v1772, %v1850
    %v1930 = vadd.f32 %v1772, %v1854
    %v1931 = vadd.f32 %v1777, %v1842
    %v1932 = vadd.f32 %v1777, %v1846
    %v1933 = vadd.f32 %v1777, %v1850
    %v1934 = vadd.f32 %v1777, %v1854
    %v1935 = vadd.f32 %v1782, %v1842
    %v1936 = vadd.f32 %v1782, %v1846
    %v1937 = vadd.f32 %v1782, %v1850
    %v1938 = vadd.f32 %v1782, %v1854
    %v1939 = vadd.f32 %v1787, %v1842
    %v1940 = vadd.f32 %v1787, %v1846
    %v1941 = vadd.f32 %v1787, %v1850
    %v1942 = vadd.f32 %v1787, %v1854
    %v1943 = vadd.f32 %v1792, %v1842
    %v1944 = vadd.f32 %v1792, %v1846
    %v1945 = vadd.f32 %v1792, %v1850
    %v1946 = vadd.f32 %v1792, %v1854
    %v1947 = vadd.f32 %v1797, %v1842
    %v1948 = vadd.f32 %v1797, %v1846
    %v1949 = vadd.f32 %v1797, %v1850
    %v1950 = vadd.f32 %v1797, %v1854
    %v1951 = vadd.f32 %v1802, %v1842
    %v1952 = vadd.f32 %v1802, %v1846
    %v1953 = vadd.f32 %v1802, %v1850
    %v1954 = vadd.f32 %v1802, %v1854
    %v1955 = vadd.f32 %v1807, %v1842
    %v1956 = vadd.f32 %v1807, %v1846
    %v1957 = vadd.f32 %v1807, %v1850
    %v1958 = vadd.f32 %v1807, %v1854
    %v1959 = vadd.f32 %v1812, %v1842
    %v1960 = vadd.f32 %v1812, %v1846
    %v1961 = vadd.f32 %v1812, %v1850
    %v1962 = vadd.f32 %v1812, %v1854
    %v1963 = vadd.f32 %v1817, %v1842
    %v1964 = vadd.f32 %v1817, %v1846
    %v1965 = vadd.f32 %v1817, %v1850
    %v1966 = vadd.f32 %v1817, %v1854
    %v1967 = vadd.f32 %v1822, %v1842
    %v1968 = vadd.f32 %v1822, %v1846
    %v1969 = vadd.f32 %v1822, %v1850
    %v1970 = vadd.f32 %v1822, %v1854
    %v1971 = vadd.f32 %v1827, %v1842
    %v1972 = vadd.f32 %v1827, %v1846
    %v1973 = vadd.f32 %v1827, %v1850
    %v1974 = vadd.f32 %v1827, %v1854
    %v1975 = vadd.f32 %v1832, %v1842
    %v1976 = vadd.f32 %v1832, %v1846
    %v1977 = vadd.f32 %v1832, %v1850
    %v1978 = vadd.f32 %v1832, %v1854
    %v1979 = vadd.f32 %v1837, %v1842
    %v1980 = vadd.f32 %v1837, %v1846
    %v1981 = vadd.f32 %v1837, %v1850
    %v1982 = vadd.f32 %v1837, %v1854
    %v1983 = vadd.f32 %v1855, %v1200
    %v1984 = vadd.f32 %v1856, %v1202
    %v1985 = vadd.f32 %v1857, %v1457
    %v1986 = vadd.f32 %v1858, %v1459
    %v1987 = vadd.f32 %v1859, %v1206
    %v1988 = vadd.f32 %v1860, %v1208
    %v1989 = vadd.f32 %v1861, %v1463
    %v1990 = vadd.f32 %v1862, %v1465
    %v1991 = vadd.f32 %v1863, %v1212
    %v1992 = vadd.f32 %v1864, %v1214
    %v1993 = vadd.f32 %v1865, %v1469
    %v1994 = vadd.f32 %v1866, %v1471
    %v1995 = vadd.f32 %v1867, %v1218
    %v1996 = vadd.f32 %v1868, %v1220
    %v1997 = vadd.f32 %v1869, %v1475
    %v1998 = vadd.f32 %v1870, %v1477
    %v1999 = vadd.f32 %v1871, %v1224
    %v2000 = vadd.f32 %v1872, %v1226
    %v2001 = vadd.f32 %v1873, %v1481
    %v2002 = vadd.f32 %v1874, %v1483
    %v2003 = vadd.f32 %v1875, %v1230
    %v2004 = vadd.f32 %v1876, %v1232
    %v2005 = vadd.f32 %v1877, %v1487
    %v2006 = vadd.f32 %v1878, %v1489
    %v2007 = vadd.f32 %v1879, %v1236
    %v2008 = vadd.f32 %v1880, %v1238
    %v2009 = vadd.f32 %v1881, %v1493
    %v2010 = vadd.f32 %v1882, %v1495
    %v2011 = vadd.f32 %v1883, %v1242
    %v2012 = vadd.f32 %v1884, %v1244
    %v2013 = vadd.f32 %v1885, %v1499
    %v2014 = vadd.f32 %v1886, %v1501
    %v2015 = vadd.f32 %v1887, %v1248
    %v2016 = vadd.f32 %v1888, %v1250
    %v2017 = vadd.f32 %v1889, %v1505
    %v2018 = vadd.f32 %v1890, %v1507
    %v2019 = vadd.f32 %v1891, %v1254
    %v2020 = vadd.f32 %v1892, %v1256
    %v2021 = vadd.f32 %v1893, %v1511
    %v2022 = vadd.f32 %v1894, %v1513
    %v2023 = vadd.f32 %v1895, %v1260
    %v2024 = vadd.f32 %v1896, %v1262
    %v2025 = vadd.f32 %v1897, %v1517
    %v2026 = vadd.f32 %v1898, %v1519
    %v2027 = vadd.f32 %v1899, %v1266
    %v2028 = vadd.f32 %v1900, %v1268
    %v2029 = vadd.f32 %v1901, %v1523
    %v2030 = vadd.f32 %v1902, %v1525
    %v2031 = vadd.f32 %v1903, %v1272
    %v2032 = vadd.f32 %v1904, %v1274
    %v2033 = vadd.f32 %v1905, %v1529
    %v2034 = vadd.f32 %v1906, %v1531
    %v2035 = vadd.f32 %v1907, %v1278
    %v2036 = vadd.f32 %v1908, %v1280
    %v2037 = vadd.f32 %v1909, %v1535
    %v2038 = vadd.f32 %v1910, %v1537
    %v2039 = vadd.f32 %v1911, %v1284
    %v2040 = vadd.f32 %v1912, %v1286
    %v2041 = vadd.f32 %v1913, %v1541
    %v2042 = vadd.f32 %v1914, %v1543
    %v2043 = vadd.f32 %v1915, %v1290
    %v2044 = vadd.f32 %v1916, %v1292
    %v2045 = vadd.f32 %v1917, %v1547
    %v2046 = vadd.f32 %v1918, %v1549
    %v2047 = vadd.f32 %v1919, %v1296
    %v2048 = vadd.f32 %v1920, %v1298
    %v2049 = vadd.f32 %v1921, %v1553
    %v2050 = vadd.f32 %v1922, %v1555
    %v2051 = vadd.f32 %v1923, %v1302
    %v2052 = vadd.f32 %v1924, %v1304
    %v2053 = vadd.f32 %v1925, %v1559
    %v2054 = vadd.f32 %v1926, %v1561
    %v2055 = vadd.f32 %v1927, %v1308
    %v2056 = vadd.f32 %v1928, %v1310
    %v2057 = vadd.f32 %v1929, %v1565
    %v2058 = vadd.f32 %v1930, %v1567
    %v2059 = vadd.f32 %v1931, %v1314
    %v2060 = vadd.f32 %v1932, %v1316
    %v2061 = vadd.f32 %v1933, %v1571
    %v2062 = vadd.f32 %v1934, %v1573
    %v2063 = vadd.f32 %v1935, %v1320
    %v2064 = vadd.f32 %v1936, %v1322
    %v2065 = vadd.f32 %v1937, %v1577
    %v2066 = vadd.f32 %v1938, %v1579
    %v2067 = vadd.f32 %v1939, %v1326
    %v2068 = vadd.f32 %v1940, %v1328
    %v2069 = vadd.f32 %v1941, %v1583
    %v2070 = vadd.f32 %v1942, %v1585
    %v2071 = vadd.f32 %v1943, %v1332
    %v2072 = vadd.f32 %v1944, %v1334
    %v2073 = vadd.f32 %v1945, %v1589
    %v2074 = vadd.f32 %v1946, %v1591
    %v2075 = vadd.f32 %v1947, %v1338
    %v2076 = vadd.f32 %v1948, %v1340
    %v2077 = vadd.f32 %v1949, %v1595
    %v2078 = vadd.f32 %v1950, %v1597
    %v2079 = vadd.f32 %v1951, %v1344
    %v2080 = vadd.f32 %v1952, %v1346
    %v2081 = vadd.f32 %v1953, %v1601
    %v2082 = vadd.f32 %v1954, %v1603
    %v2083 = vadd.f32 %v1955, %v1350
    %v2084 = vadd.f32 %v1956, %v1352
    %v2085 = vadd.f32 %v1957, %v1607
    %v2086 = vadd.f32 %v1958, %v1609
    %v2087 = vadd.f32 %v1959, %v1356
    %v2088 = vadd.f32 %v1960, %v1358
    %v2089 = vadd.f32 %v1961, %v1613
    %v2090 = vadd.f32 %v1962, %v1615
    %v2091 = vadd.f32 %v1963, %v1362
    %v2092 = vadd.f32 %v1964, %v1364
    %v2093 = vadd.f32 %v1965, %v1619
    %v2094 = vadd.f32 %v1966, %v1621
    %v2095 = vadd.f32 %v1967, %v1368
    %v2096 = vadd.f32 %v1968, %v1370
    %v2097 = vadd.f32 %v1969, %v1625
    %v2098 = vadd.f32 %v1970, %v1627
    %v2099 = vadd.f32 %v1971, %v1374
    %v2100 = vadd.f32 %v1972, %v1376
    %v2101 = vadd.f32 %v1973, %v1631
    %v2102 = vadd.f32 %v1974, %v1633
    %v2103 = vadd.f32 %v1975, %v1380
    %v2104 = vadd.f32 %v1976, %v1382
    %v2105 = vadd.f32 %v1977, %v1637
    %v2106 = vadd.f32 %v1978, %v1639
    %v2107 = vadd.f32 %v1979, %v1386
    %v2108 = vadd.f32 %v1980, %v1388
    %v2109 = vadd.f32 %v1981, %v1643
    %v2110 = vadd.f32 %v1982, %v1645
    %v2111 = vmin.f32 %v1983, %v1987
    %v2112 = vmin.f32 %v2111, %v1991
    %v2113 = vmin.f32 %v2112, %v1995
    %v2114 = vmin.f32 %v2113, %v1999
    %v2115 = vmin.f32 %v2114, %v2003
    %v2116 = vmin.f32 %v2115, %v2007
    %v2117 = vmin.f32 %v2116, %v2011
    %v2118 = vmin.f32 %v2117, %v2015
    %v2119 = vmin.f32 %v2118, %v2019
    %v2120 = vmin.f32 %v2119, %v2023
    %v2121 = vmin.f32 %v2120, %v2027
    %v2122 = vmin.f32 %v2121, %v2031
    %v2123 = vmin.f32 %v2122, %v2035
    %v2124 = vmin.f32 %v2123, %v2039
    %v2125 = vmin.f32 %v2124, %v2043
    %v2126 = vmin.f32 %v2125, %v2047
    %v2127 = vmin.f32 %v2126, %v2051
    %v2128 = vmin.f32 %v2127, %v2055
    %v2129 = vmin.f32 %v2128, %v2059
    %v2130 = vmin.f32 %v2129, %v2063
    %v2131 = vmin.f32 %v2130, %v2067
    %v2132 = vmin.f32 %v2131, %v2071
    %v2133 = vmin.f32 %v2132, %v2075
    %v2134 = vmin.f32 %v2133, %v2079
    %v2135 = vmin.f32 %v2134, %v2083
    %v2136 = vmin.f32 %v2135, %v2087
    %v2137 = vmin.f32 %v2136, %v2091
    %v2138 = vmin.f32 %v2137, %v2095
    %v2139 = vmin.f32 %v2138, %v2099
    %v2140 = vmin.f32 %v2139, %v2103
    %v2141 = vmin.f32 %v2140, %v2107
    %v2142 = vrot.slane %v2141, 4
    %v2143 = vmin.f32 %v2141, %v2142
    %v2144 = vrot.slane %v2143, 2
    %v2145 = vmin.f32 %v2143, %v2144
    %v2146 = vrot.slane %v2145, 1
    %v2147 = vmin.f32 %v2145, %v2146
    %v2148 = vmin.f32 %v1984, %v1988
    %v2149 = vmin.f32 %v2148, %v1992
    %v2150 = vmin.f32 %v2149, %v1996
    %v2151 = vmin.f32 %v2150, %v2000
    %v2152 = vmin.f32 %v2151, %v2004
    %v2153 = vmin.f32 %v2152, %v2008
    %v2154 = vmin.f32 %v2153, %v2012
    %v2155 = vmin.f32 %v2154, %v2016
    %v2156 = vmin.f32 %v2155, %v2020
    %v2157 = vmin.f32 %v2156, %v2024
    %v2158 = vmin.f32 %v2157, %v2028
    %v2159 = vmin.f32 %v2158, %v2032
    %v2160 = vmin.f32 %v2159, %v2036
    %v2161 = vmin.f32 %v2160, %v2040
    %v2162 = vmin.f32 %v2161, %v2044
    %v2163 = vmin.f32 %v2162, %v2048
    %v2164 = vmin.f32 %v2163, %v2052
    %v2165 = vmin.f32 %v2164, %v2056
    %v2166 = vmin.f32 %v2165, %v2060
    %v2167 = vmin.f32 %v2166, %v2064
    %v2168 = vmin.f32 %v2167, %v2068
    %v2169 = vmin.f32 %v2168, %v2072
    %v2170 = vmin.f32 %v2169, %v2076
    %v2171 = vmin.f32 %v2170, %v2080
    %v2172 = vmin.f32 %v2171, %v2084
    %v2173 = vmin.f32 %v2172, %v2088
    %v2174 = vmin.f32 %v2173, %v2092
    %v2175 = vmin.f32 %v2174, %v2096
    %v2176 = vmin.f32 %v2175, %v2100
    %v2177 = vmin.f32 %v2176, %v2104
    %v2178 = vmin.f32 %v2177, %v2108
    %v2179 = vrot.slane %v2178, 4
    %v2180 = vmin.f32 %v2178, %v2179
    %v2181 = vrot.slane %v2180, 2
    %v2182 = vmin.f32 %v2180, %v2181
    %v2183 = vrot.slane %v2182, 1
    %v2184 = vmin.f32 %v2182, %v2183
    %v2185 = vmin.f32 %v1985, %v1989
    %v2186 = vmin.f32 %v2185, %v1993
    %v2187 = vmin.f32 %v2186, %v1997
    %v2188 = vmin.f32 %v2187, %v2001
    %v2189 = vmin.f32 %v2188, %v2005
    %v2190 = vmin.f32 %v2189, %v2009
    %v2191 = vmin.f32 %v2190, %v2013
    %v2192 = vmin.f32 %v2191, %v2017
    %v2193 = vmin.f32 %v2192, %v2021
    %v2194 = vmin.f32 %v2193, %v2025
    %v2195 = vmin.f32 %v2194, %v2029
    %v2196 = vmin.f32 %v2195, %v2033
    %v2197 = vmin.f32 %v2196, %v2037
    %v2198 = vmin.f32 %v2197, %v2041
    %v2199 = vmin.f32 %v2198, %v2045
    %v2200 = vmin.f32 %v2199, %v2049
    %v2201 = vmin.f32 %v2200, %v2053
    %v2202 = vmin.f32 %v2201, %v2057
    %v2203 = vmin.f32 %v2202, %v2061
    %v2204 = vmin.f32 %v2203, %v2065
    %v2205 = vmin.f32 %v2204, %v2069
    %v2206 = vmin.f32 %v2205, %v2073
    %v2207 = vmin.f32 %v2206, %v2077
    %v2208 = vmin.f32 %v2207, %v2081
    %v2209 = vmin.f32 %v2208, %v2085
    %v2210 = vmin.f32 %v2209, %v2089
    %v2211 = vmin.f32 %v2210, %v2093
    %v2212 = vmin.f32 %v2211, %v2097
    %v2213 = vmin.f32 %v2212, %v2101
    %v2214 = vmin.f32 %v2213, %v2105
    %v2215 = vmin.f32 %v2214, %v2109
    %v2216 = vrot.slane %v2215, 4
    %v2217 = vmin.f32 %v2215, %v2216
    %v2218 = vrot.slane %v2217, 2
    %v2219 = vmin.f32 %v2217, %v2218
    %v2220 = vrot.slane %v2219, 1
    %v2221 = vmin.f32 %v2219, %v2220
    %v2222 = vmin.f32 %v1986, %v1990
    %v2223 = vmin.f32 %v2222, %v1994
    %v2224 = vmin.f32 %v2223, %v1998
    %v2225 = vmin.f32 %v2224, %v2002
    %v2226 = vmin.f32 %v2225, %v2006
    %v2227 = vmin.f32 %v2226, %v2010
    %v2228 = vmin.f32 %v2227, %v2014
    %v2229 = vmin.f32 %v2228, %v2018
    %v2230 = vmin.f32 %v2229, %v2022
    %v2231 = vmin.f32 %v2230, %v2026
    %v2232 = vmin.f32 %v2231, %v2030
    %v2233 = vmin.f32 %v2232, %v2034
    %v2234 = vmin.f32 %v2233, %v2038
    %v2235 = vmin.f32 %v2234, %v2042
    %v2236 = vmin.f32 %v2235, %v2046
    %v2237 = vmin.f32 %v2236, %v2050
    %v2238 = vmin.f32 %v2237, %v2054
    %v2239 = vmin.f32 %v2238, %v2058
    %v2240 = vmin.f32 %v2239, %v2062
    %v2241 = vmin.f32 %v2240, %v2066
    %v2242 = vmin.f32 %v2241, %v2070
    %v2243 = vmin.f32 %v2242, %v2074
    %v2244 = vmin.f32 %v2243, %v2078
    %v2245 = vmin.f32 %v2244, %v2082
    %v2246 = vmin.f32 %v2245, %v2086
    %v2247 = vmin.f32 %v2246, %v2090
    %v2248 = vmin.f32 %v2247, %v2094
    %v2249 = vmin.f32 %v2248, %v2098
    %v2250 = vmin.f32 %v2249, %v2102
    %v2251 = vmin.f32 %v2250, %v2106
    %v2252 = vmin.f32 %v2251, %v2110
    %v2253 = vrot.slane %v2252, 4
    %v2254 = vmin.f32 %v2252, %v2253
    %v2255 = vrot.slane %v2254, 2
    %v2256 = vmin.f32 %v2254, %v2255
    %v2257 = vrot.slane %v2256, 1
    %v2258 = vmin.f32 %v2256, %v2257
    %v2259 = vmax.f32 %v2147, 0.0
    %v2260 = vmax.f32 %v2184, 0.0
    %v2261 = vmax.f32 %v2221, 0.0
    %v2262 = vmax.f32 %v2258, 0.0
    %v2263 = vrsqrt.pop %v2259
    %v2264 = vmul.f32 %v2259, %v2263
    %vm2265 = vcmp.eq.f32.partialorder %v2259, inf
    %v2266 = vsel %vm2265, %v2259, %v2264
    %vm2267 = vcmp.eq.f32.partialorder %v2259, 0.0
    %v2268 = vand.u32 %v2259, 2147483648
    %v2269 = vsel %vm2267, %v2268, %v2266
    %v2270 = vrsqrt.pop %v2260
    %v2271 = vmul.f32 %v2260, %v2270
    %vm2272 = vcmp.eq.f32.partialorder %v2260, inf
    %v2273 = vsel %vm2272, %v2260, %v2271
    %vm2274 = vcmp.eq.f32.partialorder %v2260, 0.0
    %v2275 = vand.u32 %v2260, 2147483648
    %v2276 = vsel %vm2274, %v2275, %v2273
    %v2277 = vrsqrt.pop %v2261
    %v2278 = vmul.f32 %v2261, %v2277
    %vm2279 = vcmp.eq.f32.partialorder %v2261, inf
    %v2280 = vsel %vm2279, %v2261, %v2278
    %vm2281 = vcmp.eq.f32.partialorder %v2261, 0.0
    %v2282 = vand.u32 %v2261, 2147483648
    %v2283 = vsel %vm2281, %v2282, %v2280
    %v2284 = vrsqrt.pop %v2262
    %v2285 = vmul.f32 %v2262, %v2284
    %vm2286 = vcmp.eq.f32.partialorder %v2262, inf
    %v2287 = vsel %vm2286, %v2262, %v2285
    %vm2288 = vcmp.eq.f32.partialorder %v2262, 0.0
    %v2289 = vand.u32 %v2262, 2147483648
    %v2290 = vsel %vm2288, %v2289, %v2287
    %v2291 = vld [vmem:[#allocation4] sm:$0xff]
    %v2292 = vld [vmem:[#allocation4 + $0x8] sm:$0xff]
    %v2293 = vld [vmem:[#allocation4 + $0x10] sm:$0xff]
    %v2294 = vld [vmem:[#allocation4 + $0x18] sm:$0xff]
    %v2295 = vld [vmem:[#allocation4 + $0x20] sm:$0xff]
    %v2296 = vld [vmem:[#allocation4 + $0x28] sm:$0xff]
    %v2297 = vld [vmem:[#allocation4 + $0x30] sm:$0xff]
    %v2298 = vld [vmem:[#allocation4 + $0x38] sm:$0xff]
    %v2299 = vld [vmem:[#allocation4 + $0x40] sm:$0xff]
    %v2300 = vld [vmem:[#allocation4 + $0x48] sm:$0xff]
    %v2301 = vld [vmem:[#allocation4 + $0x50] sm:$0xff]
    %v2302 = vld [vmem:[#allocation4 + $0x58] sm:$0xff]
    %v2303 = vld [vmem:[#allocation4 + $0x60] sm:$0xff]
    %v2304 = vld [vmem:[#allocation4 + $0x68] sm:$0xff]
    %v2305 = vld [vmem:[#allocation4 + $0x70] sm:$0xff]
    %v2306 = vld [vmem:[#allocation4 + $0x78] sm:$0xff]
    %v2307 = vld [vmem:[#allocation4 + $0x80] sm:$0xff]
    %v2308 = vld [vmem:[#allocation4 + $0x88] sm:$0xff]
    %v2309 = vld [vmem:[#allocation4 + $0x90] sm:$0xff]
    %v2310 = vld [vmem:[#allocation4 + $0x98] sm:$0xff]
    %v2311 = vld [vmem:[#allocation4 + $0xa0] sm:$0xff]
    %v2312 = vld [vmem:[#allocation4 + $0xa8] sm:$0xff]
    %v2313 = vld [vmem:[#allocation4 + $0xb0] sm:$0xff]
    %v2314 = vld [vmem:[#allocation4 + $0xb8] sm:$0xff]
    %v2315 = vld [vmem:[#allocation4 + $0xc0] sm:$0xff]
    %v2316 = vld [vmem:[#allocation4 + $0xc8] sm:$0xff]
    %v2317 = vld [vmem:[#allocation4 + $0xd0] sm:$0xff]
    %v2318 = vld [vmem:[#allocation4 + $0xd8] sm:$0xff]
    %v2319 = vld [vmem:[#allocation4 + $0xe0] sm:$0xff]
    %v2320 = vld [vmem:[#allocation4 + $0xe8] sm:$0xff]
    %v2321 = vld [vmem:[#allocation4 + $0xf0] sm:$0xff]
    %v2322 = vld [vmem:[#allocation4 + $0xf8] sm:$0xff]
    %v2323 = vld [vmem:[#allocation6] sm:$0x1]
    %v2324 = vmin.f32 %v2291, %v1983
    %v2325 = vmin.f32 %v2292, %v1987
    %v2326 = vmin.f32 %v2293, %v1991
    %v2327 = vmin.f32 %v2294, %v1995
    %v2328 = vmin.f32 %v2295, %v1999
    %v2329 = vmin.f32 %v2296, %v2003
    %v2330 = vmin.f32 %v2297, %v2007
    %v2331 = vmin.f32 %v2298, %v2011
    %v2332 = vmin.f32 %v2299, %v2015
    %v2333 = vmin.f32 %v2300, %v2019
    %v2334 = vmin.f32 %v2301, %v2023
    %v2335 = vmin.f32 %v2302, %v2027
    %v2336 = vmin.f32 %v2303, %v2031
    %v2337 = vmin.f32 %v2304, %v2035
    %v2338 = vmin.f32 %v2305, %v2039
    %v2339 = vmin.f32 %v2306, %v2043
    %v2340 = vmin.f32 %v2307, %v2047
    %v2341 = vmin.f32 %v2308, %v2051
    %v2342 = vmin.f32 %v2309, %v2055
    %v2343 = vmin.f32 %v2310, %v2059
    %v2344 = vmin.f32 %v2311, %v2063
    %v2345 = vmin.f32 %v2312, %v2067
    %v2346 = vmin.f32 %v2313, %v2071
    %v2347 = vmin.f32 %v2314, %v2075
    %v2348 = vmin.f32 %v2315, %v2079
    %v2349 = vmin.f32 %v2316, %v2083
    %v2350 = vmin.f32 %v2317, %v2087
    %v2351 = vmin.f32 %v2318, %v2091
    %v2352 = vmin.f32 %v2319, %v2095
    %v2353 = vmin.f32 %v2320, %v2099
    %v2354 = vmin.f32 %v2321, %v2103
    %v2355 = vmin.f32 %v2322, %v2107
    %v2356 = vadd.f32 %v2323, %v2269
    %v2357 = vmin.f32 %v2324, %v1984
    %v2358 = vmin.f32 %v2325, %v1988
    %v2359 = vmin.f32 %v2326, %v1992
    %v2360 = vmin.f32 %v2327, %v1996
    %v2361 = vmin.f32 %v2328, %v2000
    %v2362 = vmin.f32 %v2329, %v2004
    %v2363 = vmin.f32 %v2330, %v2008
    %v2364 = vmin.f32 %v2331, %v2012
    %v2365 = vmin.f32 %v2332, %v2016
    %v2366 = vmin.f32 %v2333, %v2020
    %v2367 = vmin.f32 %v2334, %v2024
    %v2368 = vmin.f32 %v2335, %v2028
    %v2369 = vmin.f32 %v2336, %v2032
    %v2370 = vmin.f32 %v2337, %v2036
    %v2371 = vmin.f32 %v2338, %v2040
    %v2372 = vmin.f32 %v2339, %v2044
    %v2373 = vmin.f32 %v2340, %v2048
    %v2374 = vmin.f32 %v2341, %v2052
    %v2375 = vmin.f32 %v2342, %v2056
    %v2376 = vmin.f32 %v2343, %v2060
    %v2377 = vmin.f32 %v2344, %v2064
    %v2378 = vmin.f32 %v2345, %v2068
    %v2379 = vmin.f32 %v2346, %v2072
    %v2380 = vmin.f32 %v2347, %v2076
    %v2381 = vmin.f32 %v2348, %v2080
    %v2382 = vmin.f32 %v2349, %v2084
    %v2383 = vmin.f32 %v2350, %v2088
    %v2384 = vmin.f32 %v2351, %v2092
    %v2385 = vmin.f32 %v2352, %v2096
    %v2386 = vmin.f32 %v2353, %v2100
    %v2387 = vmin.f32 %v2354, %v2104
    %v2388 = vmin.f32 %v2355, %v2108
    %v2389 = vadd.f32 %v2356, %v2276
    %v2390 = vmin.f32 %v2357, %v1985
    %v2391 = vmin.f32 %v2358, %v1989
    %v2392 = vmin.f32 %v2359, %v1993
    %v2393 = vmin.f32 %v2360, %v1997
    %v2394 = vmin.f32 %v2361, %v2001
    %v2395 = vmin.f32 %v2362, %v2005
    %v2396 = vmin.f32 %v2363, %v2009
    %v2397 = vmin.f32 %v2364, %v2013
    %v2398 = vmin.f32 %v2365, %v2017
    %v2399 = vmin.f32 %v2366, %v2021
    %v2400 = vmin.f32 %v2367, %v2025
    %v2401 = vmin.f32 %v2368, %v2029
    %v2402 = vmin.f32 %v2369, %v2033
    %v2403 = vmin.f32 %v2370, %v2037
    %v2404 = vmin.f32 %v2371, %v2041
    %v2405 = vmin.f32 %v2372, %v2045
    %v2406 = vmin.f32 %v2373, %v2049
    %v2407 = vmin.f32 %v2374, %v2053
    %v2408 = vmin.f32 %v2375, %v2057
    %v2409 = vmin.f32 %v2376, %v2061
    %v2410 = vmin.f32 %v2377, %v2065
    %v2411 = vmin.f32 %v2378, %v2069
    %v2412 = vmin.f32 %v2379, %v2073
    %v2413 = vmin.f32 %v2380, %v2077
    %v2414 = vmin.f32 %v2381, %v2081
    %v2415 = vmin.f32 %v2382, %v2085
    %v2416 = vmin.f32 %v2383, %v2089
    %v2417 = vmin.f32 %v2384, %v2093
    %v2418 = vmin.f32 %v2385, %v2097
    %v2419 = vmin.f32 %v2386, %v2101
    %v2420 = vmin.f32 %v2387, %v2105
    %v2421 = vmin.f32 %v2388, %v2109
    %v2422 = vadd.f32 %v2389, %v2283
    %v2423 = vmin.f32 %v2390, %v1986
    %v2424 = vmin.f32 %v2391, %v1990
    %v2425 = vmin.f32 %v2392, %v1994
    %v2426 = vmin.f32 %v2393, %v1998
    %v2427 = vmin.f32 %v2394, %v2002
    %v2428 = vmin.f32 %v2395, %v2006
    %v2429 = vmin.f32 %v2396, %v2010
    %v2430 = vmin.f32 %v2397, %v2014
    %v2431 = vmin.f32 %v2398, %v2018
    %v2432 = vmin.f32 %v2399, %v2022
    %v2433 = vmin.f32 %v2400, %v2026
    %v2434 = vmin.f32 %v2401, %v2030
    %v2435 = vmin.f32 %v2402, %v2034
    %v2436 = vmin.f32 %v2403, %v2038
    %v2437 = vmin.f32 %v2404, %v2042
    %v2438 = vmin.f32 %v2405, %v2046
    %v2439 = vmin.f32 %v2406, %v2050
    %v2440 = vmin.f32 %v2407, %v2054
    %v2441 = vmin.f32 %v2408, %v2058
    %v2442 = vmin.f32 %v2409, %v2062
    %v2443 = vmin.f32 %v2410, %v2066
    %v2444 = vmin.f32 %v2411, %v2070
    %v2445 = vmin.f32 %v2412, %v2074
    %v2446 = vmin.f32 %v2413, %v2078
    %v2447 = vmin.f32 %v2414, %v2082
    %v2448 = vmin.f32 %v2415, %v2086
    %v2449 = vmin.f32 %v2416, %v2090
    %v2450 = vmin.f32 %v2417, %v2094
    %v2451 = vmin.f32 %v2418, %v2098
    %v2452 = vmin.f32 %v2419, %v2102
    %v2453 = vmin.f32 %v2420, %v2106
    %v2454 = vmin.f32 %v2421, %v2110
    %v2455 = vadd.f32 %v2422, %v2290
    %2456 = vst [vmem:[#allocation4] sm:$0xff] %v2423
    %2457 = vst [vmem:[#allocation4 + $0x8] sm:$0xff] %v2424
    %2458 = vst [vmem:[#allocation4 + $0x10] sm:$0xff] %v2425
    %2459 = vst [vmem:[#allocation4 + $0x18] sm:$0xff] %v2426
    %2460 = vst [vmem:[#allocation4 + $0x20] sm:$0xff] %v2427
    %2461 = vst [vmem:[#allocation4 + $0x28] sm:$0xff] %v2428
    %2462 = vst [vmem:[#allocation4 + $0x30] sm:$0xff] %v2429
    %2463 = vst [vmem:[#allocation4 + $0x38] sm:$0xff] %v2430
    %2464 = vst [vmem:[#allocation4 + $0x40] sm:$0xff] %v2431
    %2465 = vst [vmem:[#allocation4 + $0x48] sm:$0xff] %v2432
    %2466 = vst [vmem:[#allocation4 + $0x50] sm:$0xff] %v2433
    %2467 = vst [vmem:[#allocation4 + $0x58] sm:$0xff] %v2434
    %2468 = vst [vmem:[#allocation4 + $0x60] sm:$0xff] %v2435
    %2469 = vst [vmem:[#allocation4 + $0x68] sm:$0xff] %v2436
    %2470 = vst [vmem:[#allocation4 + $0x70] sm:$0xff] %v2437
    %2471 = vst [vmem:[#allocation4 + $0x78] sm:$0xff] %v2438
    %2472 = vst [vmem:[#allocation4 + $0x80] sm:$0xff] %v2439
    %2473 = vst [vmem:[#allocation4 + $0x88] sm:$0xff] %v2440
    %2474 = vst [vmem:[#allocation4 + $0x90] sm:$0xff] %v2441
    %2475 = vst [vmem:[#allocation4 + $0x98] sm:$0xff] %v2442
    %2476 = vst [vmem:[#allocation4 + $0xa0] sm:$0xff] %v2443
    %2477 = vst [vmem:[#allocation4 + $0xa8] sm:$0xff] %v2444
    %2478 = vst [vmem:[#allocation4 + $0xb0] sm:$0xff] %v2445
    %2479 = vst [vmem:[#allocation4 + $0xb8] sm:$0xff] %v2446
    %2480 = vst [vmem:[#allocation4 + $0xc0] sm:$0xff] %v2447
    %2481 = vst [vmem:[#allocation4 + $0xc8] sm:$0xff] %v2448
    %2482 = vst [vmem:[#allocation4 + $0xd0] sm:$0xff] %v2449
    %2483 = vst [vmem:[#allocation4 + $0xd8] sm:$0xff] %v2450
    %2484 = vst [vmem:[#allocation4 + $0xe0] sm:$0xff] %v2451
    %2485 = vst [vmem:[#allocation4 + $0xe8] sm:$0xff] %v2452
    %2486 = vst [vmem:[#allocation4 + $0xf0] sm:$0xff] %v2453
    %2487 = vst [vmem:[#allocation4 + $0xf8] sm:$0xff] %v2454
    %2488 = vst [vmem:[#allocation6] sm:$0x1] %v2455
    // Predicated region
    $region14: #{tpu_custom_call.1} parent=1 // pred_check
      _
    $region15: #{tpu_custom_call.1} parent=1 // pred_check_branch
      %2490 = sbr.rel (0) target = $region17
    $region16: #{tpu_custom_call.1} parent=1 // pred_region
      %s2492 = ssub.s32 4096, 4096
      %2493 = vsyncadd [#allocation5], %s2492
      %s2494 = sshll.u32 [#allocation4], 4
      %s2495 = int_to_ptr.vmem [resolvable:$true] %s2494
      %2500 = dma.vmem_to_hbm [thread:$0]  %s2495, 4096, %s2, [#allocation5], 128, 128, 8
    $region17: #{tpu_custom_call.1} parent=1 // pred_fallthru
      _
    // Predicated region
    $region18: #{tpu_custom_call.1} parent=1 // pred_check
      _
    $region19: #{tpu_custom_call.1} parent=1 // pred_check_branch
      %2502 = sbr.rel (0) target = $region21
    $region20: #{tpu_custom_call.1} parent=1 // pred_region
      %s2504 = ssub.s32 16, 16
      %2505 = vsyncadd [#allocation7], %s2504
      %s2507 = sshll.u32 [#allocation6], 4
      %s2508 = int_to_ptr.vmem [resolvable:$true] %s2507
      %2510 = dma.vmem_to_hbm [thread:$0]  %s2508, 16, %s3, [#allocation7]
    $region21: #{tpu_custom_call.1} parent=1 // pred_fallthru
      _
    // Predicated region
    $region22: #{tpu_custom_call.1} parent=1 // pred_check
      _
    $region23: #{tpu_custom_call.1} parent=1 // pred_check_branch
      %2512 = sbr.rel (0) target = $region25
    $region24: #{tpu_custom_call.1} parent=1 // pred_region
      %2513 = dma.done [#allocation5], 4096
    $region25: #{tpu_custom_call.1} parent=1 // pred_fallthru
      _
    // Predicated region
    $region26: #{tpu_custom_call.1} parent=1 // pred_check
      _
    $region27: #{tpu_custom_call.1} parent=1 // pred_check_branch
      %2515 = sbr.rel (0) target = $region29
    $region28: #{tpu_custom_call.1} parent=1 // pred_region
      %2516 = dma.done [#allocation7], 16
    $region29: #{tpu_custom_call.1} parent=1 // pred_fallthru
      _
    %2517 = vsyncpa [#allocation5], 1
    %2518 = vsyncpa [#allocation7], 1

</llo_original>
